<compile_context>
chip_gen: v7x
topology: tpu7x:2x2x1
jax: 0.10.0
libtpu: 0.0.40
codegen_flags: <defaults>
</compile_context>

<pallas_src>
import jax
import jax.numpy as jnp
from jax.experimental import pallas as pl
from jax.experimental.pallas import tpu as pltpu


# ----------------------------------------------------------------------------- kernel
def _bilstm_kernel(zx_f_ref, zx_b_ref, whh_f_ref, whh_b_ref, bounds_ref, out_ref,
                   hf_ref, cf_ref, hb_ref, cb_ref):
    """One T-tile of the bidirectional LSTM recurrence (input projection pre-hoisted).

    zx_f_ref  : [tT, B, 4H] bf16  x@Wih_f + b_f for fwd steps t0..t0+tT-1 (gate order i,f,o,g)
    zx_b_ref  : [tT, B, 4H] bf16  x@Wih_b + b_b, block chosen time-reversed via index_map
    whh_f_ref : [H, 4H]     bf16  recurrent weights, fwd direction
    whh_b_ref : [H, 4H]     bf16  recurrent weights, bwd direction
    bounds_ref: [B, 2]      i32   col 0 = seq length, col 1 = T - length
    out_ref   : [B, 2H]     f32   concat(h_fwd_final, h_bwd_final)   (written at last tile)
    hf/cf/hb/cb_ref : [B, H] f32  VMEM scratch carries, persist across grid steps
    """
    tT, B, H4 = zx_f_ref.shape
    H = H4 // 4
    t0 = pl.program_id(0) * tT

    # zero initial state (initHidden) on the first T-tile only
    @pl.when(pl.program_id(0) == 0)
    def _():
        hf_ref[...] = jnp.zeros_like(hf_ref)
        cf_ref[...] = jnp.zeros_like(cf_ref)
        hb_ref[...] = jnp.zeros_like(hb_ref)
        cb_ref[...] = jnp.zeros_like(cb_ref)

    whh_f = whh_f_ref[...]                       # bf16, loaded once per tile
    whh_b = whh_b_ref[...]
    len_v = bounds_ref[:, 0:1]                   # [B,1] i32: fwd valid while t < len
    start_v = bounds_ref[:, 1:2]                 # [B,1] i32: bwd valid while t >= T-len

    def gates(z, c):
        # gate order i, f, o, g -> one contiguous sigmoid slice + one tanh slice
        sg = jax.nn.sigmoid(z[:, 0:3 * H])
        i_g = sg[:, 0:H]
        f_g = sg[:, H:2 * H]
        o_g = sg[:, 2 * H:3 * H]
        g_g = jnp.tanh(z[:, 3 * H:4 * H])
        c_n = f_g * c + i_g * g_g
        return o_g * jnp.tanh(c_n), c_n

    def step(tt, carry):
        h_f, c_f, h_b, c_b = carry               # f32 carries
        t = t0 + tt                              # global step index
        # two independent bf16 MXU pushes per step; f32 accumulate
        z_f = (jnp.dot(h_f.astype(jnp.bfloat16), whh_f,
                       preferred_element_type=jnp.float32)
               + zx_f_ref[tt].astype(jnp.float32))
        z_b = (jnp.dot(h_b.astype(jnp.bfloat16), whh_b,
                       preferred_element_type=jnp.float32)
               + zx_b_ref[tT - 1 - tt].astype(jnp.float32))   # reads global x[T-1-t]
        hf_n, cf_n = gates(z_f, c_f)
        hb_n, cb_n = gates(z_b, c_b)
        vf = len_v > t                           # packing validity, fwd
        vb = start_v <= t                        # packing validity, bwd
        h_f = jnp.where(vf, hf_n, h_f)
        c_f = jnp.where(vf, cf_n, c_f)
        h_b = jnp.where(vb, hb_n, h_b)
        c_b = jnp.where(vb, cb_n, c_b)
        return h_f, c_f, h_b, c_b

    carry = (hf_ref[...], cf_ref[...], hb_ref[...], cb_ref[...])
    h_f, c_f, h_b, c_b = jax.lax.fori_loop(0, tT, step, carry, unroll=True)

    # persist carries for the next T-tile
    hf_ref[...] = h_f
    cf_ref[...] = c_f
    hb_ref[...] = h_b
    cb_ref[...] = c_b

    @pl.when(pl.program_id(0) == pl.num_programs(0) - 1)
    def _():
        out_ref[...] = jnp.concatenate([h_f, h_b], axis=1)    # single contiguous store


# ----------------------------------------------------------------------------- wrapper
def _reorder_gates(w, H):
    # last-axis gate order: PyTorch [i, f, g, o] -> kernel [i, f, o, g]
    return jnp.concatenate(
        [w[..., 0:2 * H], w[..., 3 * H:4 * H], w[..., 2 * H:3 * H]], axis=-1)


def _pick_time_tile(T, B, H, max_tile=8, vmem_budget=8 << 20):
    """Largest divisor of T that is <= max_tile (unroll cap) and keeps the
    double-buffered bf16 zx tiles (2 arrays x 2 buffers) within the VMEM budget.
    Conservative enough for v7x's 64 MiB physical / 32 MiB scoped VMEM."""
    best = 1
    for cand in range(1, min(T, max_tile) + 1):
        if T % cand == 0 and 2 * 2 * cand * B * 4 * H * 2 <= vmem_budget:
            best = cand
    return best


@jax.jit
def lstm_encoder_forward(word_embs, pos_id, dep_id, mask, params):
    """word_embs: [B, T, emb_dim] f32, pos_id/dep_id: [B, T] i32, mask: [B, T] f32."""
    B, T, _ = word_embs.shape
    H = params["whh"].shape[1]

    # glue: embedding lookups + concat (gather; hot path is the LSTM recurrence)
    pos_embs = params["embed_pos"][pos_id]                               # [B, T, pos_dim]
    dep_embs = params["embed_dep"][dep_id]                               # [B, T, dep_dim]
    x = jnp.concatenate([word_embs, pos_embs, dep_embs], -1).astype(jnp.float32)
    D = x.shape[-1]

    # one-time weight prep: gate reorder + bf16 for MXU-native operands
    wih_r = _reorder_gates(params["wih"], H)                             # [2, D, 4H]
    whh_r = _reorder_gates(params["whh"], H)                             # [2, H, 4H]
    b_r = _reorder_gates(params["bias"], H)                              # [2, 1, 4H]
    wih_cat = jnp.concatenate([wih_r[0], wih_r[1]], axis=1)              # [D, 8H]
    b_cat = jnp.concatenate([b_r[0], b_r[1]], axis=1)                    # [1, 8H]
    whh_f = whh_r[0].astype(jnp.bfloat16)                                # [H, 4H]
    whh_b = whh_r[1].astype(jnp.bfloat16)                                # [H, 4H]

    # hoisted input projection: ONE matmul covers all T steps and both directions
    # (default precision; bf16 storage halves the HBM->VMEM stream into the kernel)
    x_t = jnp.swapaxes(x, 0, 1).reshape(T * B, D)                        # time-major
    zx = (x_t @ wih_cat + b_cat).reshape(T, B, 8 * H)
    zx_f = zx[..., :4 * H].astype(jnp.bfloat16)                          # [T, B, 4H]
    zx_b = zx[..., 4 * H:].astype(jnp.bfloat16)                          # [T, B, 4H]

    # packing validity as tiny per-row bounds (compares happen in-kernel on the VPU)
    # TODO(synk): assumes mask is a contiguous prefix (pack_padded_sequence semantics).
    lengths = mask.sum(axis=1).astype(jnp.int32)                         # [B]
    bounds = jnp.stack([lengths, T - lengths], axis=1)                   # [B, 2] i32

    tT = _pick_time_tile(T, B, H)
    nT = T // tT

    out = pl.pallas_call(
        _bilstm_kernel,
        out_shape=jax.ShapeDtypeStruct((B, 2 * H), jnp.float32),
        grid_spec=pltpu.PrefetchScalarGridSpec(
            num_scalar_prefetch=0,
            grid=(nT,),
            in_specs=[
                # fwd zx: streamed forward in time
                pl.BlockSpec((tT, B, 4 * H), lambda t: (t, 0, 0)),
                # bwd zx: time reversal done purely in the index_map (pure DMA addressing)
                pl.BlockSpec((tT, B, 4 * H), lambda t: (nT - 1 - t, 0, 0)),
                pl.BlockSpec((H, 4 * H), lambda t: (0, 0)),
                pl.BlockSpec((H, 4 * H), lambda t: (0, 0)),
                pl.BlockSpec((B, 2), lambda t: (0, 0)),
            ],
            out_specs=pl.BlockSpec((B, 2 * H), lambda t: (0, 0)),
            scratch_shapes=[pltpu.VMEM((B, H), jnp.float32)] * 4,        # h_f, c_f, h_b, c_b
        ),
        compiler_params=pltpu.CompilerParams(
            dimension_semantics=("arbitrary",)),                         # serial recurrence
    )(zx_f, zx_b, whh_f, whh_b, bounds)
    return out


# ----------------------------------------------------------------------------- params
def make_params(key, emb_dim, pos_dim, dep_dim, hidden_dim, pos_size, dep_size):
    D = emb_dim + pos_dim + dep_dim
    H = hidden_dim
    ks = jax.random.split(key, 8)
    # embeddings ~ N(0, 1) (nn.Embedding default)
    embed_pos = jax.random.normal(ks[0], (pos_size, pos_dim), jnp.float32)
    embed_dep = jax.random.normal(ks[1], (dep_size, dep_dim), jnp.float32)
    # kaiming_normal_(a=1, fan_in) on 2D weights -> std = 1/sqrt(fan_in)
    w_ih_f = jax.random.normal(ks[2], (4 * H, D), jnp.float32) / jnp.sqrt(D)
    w_hh_f = jax.random.normal(ks[3], (4 * H, H), jnp.float32) / jnp.sqrt(H)
    w_ih_b = jax.random.normal(ks[4], (4 * H, D), jnp.float32) / jnp.sqrt(D)
    w_hh_b = jax.random.normal(ks[5], (4 * H, H), jnp.float32) / jnp.sqrt(H)
    # biases ~ N(0, 1); PyTorch has b_ih and b_hh (two per direction) -> sum them
    b_f = (jax.random.normal(ks[6], (4 * H,), jnp.float32)
           + jax.random.normal(jax.random.fold_in(ks[6], 1), (4 * H,), jnp.float32))
    b_b = (jax.random.normal(ks[7], (4 * H,), jnp.float32)
           + jax.random.normal(jax.random.fold_in(ks[7], 1), (4 * H,), jnp.float32))
    return {
        "embed_pos": embed_pos,
        "embed_dep": embed_dep,
        "wih": jnp.stack([w_ih_f.T, w_ih_b.T]),      # [2, D, 4H]  (PyTorch gate order i,f,g,o)
        "whh": jnp.stack([w_hh_f.T, w_hh_b.T]),      # [2, H, 4H]
        "bias": jnp.stack([b_f, b_b])[:, None, :],   # [2, 1, 4H]
    }


# ----------------------------------------------------------------------------- reference
def _reference(word_embs, pos_id, dep_id, mask, params):
    """Pure-JAX bi-LSTM with packing semantics.

    Applies the same bf16 operand quantization as the kernel (zx storage, hidden
    matmul operands; f32 carries/accumulation) so the comparison isolates the
    kernel mechanics (tiling, time reversal, masking, gate order)."""
    B, T, _ = word_embs.shape
    H = params["whh"].shape[1]
    bf = jnp.bfloat16
    x = jnp.concatenate(
        [word_embs, params["embed_pos"][pos_id], params["embed_dep"][dep_id]], -1)
    lens = mask.sum(1).astype(jnp.int32)

    def cell(x_t, h, c, d):
        zx = (x_t @ params["wih"][d] + params["bias"][d]).astype(bf).astype(jnp.float32)
        zh = jnp.dot(h.astype(bf), params["whh"][d].astype(bf),
                     preferred_element_type=jnp.float32)
        z = zx + zh
        i, f, g, o = (jax.nn.sigmoid(z[:, :H]), jax.nn.sigmoid(z[:, H:2 * H]),
                      jnp.tanh(z[:, 2 * H:3 * H]), jax.nn.sigmoid(z[:, 3 * H:]))
        c_n = f * c + i * g
        return o * jnp.tanh(c_n), c_n

    h_f = c_f = h_b = c_b = jnp.zeros((B, H), jnp.float32)
    for t in range(T):
        hf_n, cf_n = cell(x[:, t], h_f, c_f, 0)
        vf = (lens > t)[:, None]
        h_f, c_f = jnp.where(vf, hf_n, h_f), jnp.where(vf, cf_n, c_f)
        tb = T - 1 - t
        hb_n, cb_n = cell(x[:, tb], h_b, c_b, 1)
        vb = (lens > tb)[:, None]
        h_b, c_b = jnp.where(vb, hb_n, h_b), jnp.where(vb, cb_n, c_b)
    return jnp.concatenate([h_f, h_b], -1)


# ----------------------------------------------------------------------------- main
if __name__ == "__main__":
    emb_dim, pos_dim, dep_dim = 16, 8, 8
    hidden_dim = 32
    pos_size, dep_size = 12, 10
    B, T = 4, 16          # T=16 with tile 8 -> a 2-step T-grid (exercises the streaming)

    key = jax.random.PRNGKey(0)
    kp, kw, kpid, kdid = jax.random.split(key, 4)

    params = make_params(kp, emb_dim, pos_dim, dep_dim, hidden_dim, pos_size, dep_size)

    word_embs = jax.random.normal(kw, (B, T, emb_dim), jnp.float32)
    pos_id = jax.random.randint(kpid, (B, T), 0, pos_size, jnp.int32)
    dep_id = jax.random.randint(kdid, (B, T), 0, dep_size, jnp.int32)

    lengths = jnp.array([16, 11, 7, 4], jnp.int32)                          # variable lengths
    mask = (jnp.arange(T)[None, :] < lengths[:, None]).astype(jnp.float32)  # [B, T]

    hn = lstm_encoder_forward(word_embs, pos_id, dep_id, mask, params)
    hn = jax.block_until_ready(hn)

    ref = _reference(word_embs, pos_id, dep_id, mask, params)
    assert hn.shape == (B, 2 * hidden_dim)
    err = jnp.max(jnp.abs(hn - ref))
    assert jnp.allclose(hn, ref, atol=2e-2, rtol=2e-2), f"mismatch vs reference: {err}"

    print("KERNEL_OK")
</pallas_src>

<mosaic_0001>
module attributes {stable_mosaic.version = 11 : i64} {
  func.func @_bilstm_kernel(%arg0: i32, %arg1: memref<8x4x128xbf16, #tpu.memory_space<vmem>>, %arg2: memref<8x4x128xbf16, #tpu.memory_space<vmem>>, %arg3: memref<32x128xbf16, #tpu.memory_space<vmem>>, %arg4: memref<32x128xbf16, #tpu.memory_space<vmem>>, %arg5: memref<4x2xi32, #tpu.memory_space<vmem>>, %arg6: memref<4x64xf32, #tpu.memory_space<vmem>>, %arg7: memref<4x32xf32, #tpu.memory_space<vmem>>, %arg8: memref<4x32xf32, #tpu.memory_space<vmem>>, %arg9: memref<4x32xf32, #tpu.memory_space<vmem>>, %arg10: memref<4x32xf32, #tpu.memory_space<vmem>>) attributes {dimension_semantics = [#tpu.dimension_semantics<arbitrary>], iteration_bounds = array<i64: 2>, scalar_prefetch = 0 : i64, scratch_operands = 4 : i64, tpu.core_type = #tpu.core_type<tc>, window_params = [{transform_indices = @transform_0, window_bounds = array<i64: 8, 4, 128>}, {transform_indices = @transform_1, window_bounds = array<i64: 8, 4, 128>}, {pipeline_mode = #tpu.pipeline_mode<synchronous>, transform_indices = @transform_2, window_bounds = array<i64: 32, 128>}, {pipeline_mode = #tpu.pipeline_mode<synchronous>, transform_indices = @transform_3, window_bounds = array<i64: 32, 128>}, {pipeline_mode = #tpu.pipeline_mode<synchronous>, transform_indices = @transform_4, window_bounds = array<i64: 4, 2>}, {pipeline_mode = #tpu.pipeline_mode<synchronous>, transform_indices = @transform_5, window_bounds = array<i64: 4, 64>}]} {
    %c8_i32 = arith.constant 8 : i32
    %0 = arith.muli %arg0, %c8_i32 : i32
    %c0_i32 = arith.constant 0 : i32
    %1 = arith.cmpi eq, %arg0, %c0_i32 : i32
    %2 = arith.extui %1 : i1 to i32
    %c0_i32_0 = arith.constant 0 : i32
    %3 = arith.cmpi ne, %2, %c0_i32_0 : i32
    scf.if %3 {
      %cst_98 = arith.constant 0.000000e+00 : f32
      %531 = vector.broadcast %cst_98 : f32 to vector<4x32xf32>
      %c0_99 = arith.constant 0 : index
      %c0_100 = arith.constant 0 : index
      %532 = vector.load %arg7[%c0_99, %c0_100] : memref<4x32xf32, #tpu.memory_space<vmem>>, vector<4x32xf32>
      tpu.vector_store %arg7[%c0_99, %c0_100], %531 {strides = array<i32>} : memref<4x32xf32, #tpu.memory_space<vmem>>, vector<4x32xf32>,
      %cst_101 = arith.constant 0.000000e+00 : f32
      %533 = vector.broadcast %cst_101 : f32 to vector<4x32xf32>
      %c0_102 = arith.constant 0 : index
      %c0_103 = arith.constant 0 : index
      %534 = vector.load %arg8[%c0_102, %c0_103] : memref<4x32xf32, #tpu.memory_space<vmem>>, vector<4x32xf32>
      tpu.vector_store %arg8[%c0_102, %c0_103], %533 {strides = array<i32>} : memref<4x32xf32, #tpu.memory_space<vmem>>, vector<4x32xf32>,
      %cst_104 = arith.constant 0.000000e+00 : f32
      %535 = vector.broadcast %cst_104 : f32 to vector<4x32xf32>
      %c0_105 = arith.constant 0 : index
      %c0_106 = arith.constant 0 : index
      %536 = vector.load %arg9[%c0_105, %c0_106] : memref<4x32xf32, #tpu.memory_space<vmem>>, vector<4x32xf32>
      tpu.vector_store %arg9[%c0_105, %c0_106], %535 {strides = array<i32>} : memref<4x32xf32, #tpu.memory_space<vmem>>, vector<4x32xf32>,
      %cst_107 = arith.constant 0.000000e+00 : f32
      %537 = vector.broadcast %cst_107 : f32 to vector<4x32xf32>
      %c0_108 = arith.constant 0 : index
      %c0_109 = arith.constant 0 : index
      %538 = vector.load %arg10[%c0_108, %c0_109] : memref<4x32xf32, #tpu.memory_space<vmem>>, vector<4x32xf32>
      tpu.vector_store %arg10[%c0_108, %c0_109], %537 {strides = array<i32>} : memref<4x32xf32, #tpu.memory_space<vmem>>, vector<4x32xf32>,
    } else {
    }
    %c0 = arith.constant 0 : index
    %c0_1 = arith.constant 0 : index
    %4 = vector.load %arg3[%c0, %c0_1] : memref<32x128xbf16, #tpu.memory_space<vmem>>, vector<32x128xbf16>
    %c0_2 = arith.constant 0 : index
    %c0_3 = arith.constant 0 : index
    %5 = vector.load %arg4[%c0_2, %c0_3] : memref<32x128xbf16, #tpu.memory_space<vmem>>, vector<32x128xbf16>
    %c0_4 = arith.constant 0 : index
    %c0_5 = arith.constant 0 : index
    %6 = vector.load %arg5[%c0_4, %c0_5] : memref<4x2xi32, #tpu.memory_space<vmem>>, vector<4x1xi32>
    %c0_6 = arith.constant 0 : index
    %c1 = arith.constant 1 : index
    %7 = vector.load %arg5[%c0_6, %c1] : memref<4x2xi32, #tpu.memory_space<vmem>>, vector<4x1xi32>
    %c0_7 = arith.constant 0 : index
    %c0_8 = arith.constant 0 : index
    %8 = vector.load %arg7[%c0_7, %c0_8] : memref<4x32xf32, #tpu.memory_space<vmem>>, vector<4x32xf32>
    %c0_9 = arith.constant 0 : index
    %c0_10 = arith.constant 0 : index
    %9 = vector.load %arg8[%c0_9, %c0_10] : memref<4x32xf32, #tpu.memory_space<vmem>>, vector<4x32xf32>
    %c0_11 = arith.constant 0 : index
    %c0_12 = arith.constant 0 : index
    %10 = vector.load %arg9[%c0_11, %c0_12] : memref<4x32xf32, #tpu.memory_space<vmem>>, vector<4x32xf32>
    %c0_13 = arith.constant 0 : index
    %c0_14 = arith.constant 0 : index
    %11 = vector.load %arg10[%c0_13, %c0_14] : memref<4x32xf32, #tpu.memory_space<vmem>>, vector<4x32xf32>
    %c0_i32_15 = arith.constant 0 : i32
    %12 = arith.addi %0, %c0_i32_15 : i32
    %13 = arith.truncf %8 : vector<4x32xf32> to vector<4x32xbf16>
    %cst = arith.constant dense<0.000000e+00> : vector<4x128xf32>
    %14 = tpu.matmul %13, %4, %cst {dimension_numbers = #tpu.dot_dimension_numbers<[1], [0], [0], [1], [0, 0, 1, 1], [], []>} : vector<4x32xbf16>, vector<32x128xbf16>, vector<4x128xf32> -> vector<4x128xf32>
    %15 = arith.index_cast %c0_i32_15 : i32 to index
    %c0_16 = arith.constant 0 : index
    %c0_17 = arith.constant 0 : index
    %16 = vector.load %arg1[%15, %c0_16, %c0_17] : memref<8x4x128xbf16, #tpu.memory_space<vmem>>, vector<1x4x128xbf16>
    %17 = vector.shape_cast %16 : vector<1x4x128xbf16> to vector<4x128xbf16>
    %18 = arith.extf %17 : vector<4x128xbf16> to vector<4x128xf32>
    %19 = arith.addf %14, %18 : vector<4x128xf32>
    %20 = arith.truncf %10 : vector<4x32xf32> to vector<4x32xbf16>
    %cst_18 = arith.constant dense<0.000000e+00> : vector<4x128xf32>
    %21 = tpu.matmul %20, %5, %cst_18 {dimension_numbers = #tpu.dot_dimension_numbers<[1], [0], [0], [1], [0, 0, 1, 1], [], []>} : vector<4x32xbf16>, vector<32x128xbf16>, vector<4x128xf32> -> vector<4x128xf32>
    %c7_i32 = arith.constant 7 : i32
    %22 = arith.subi %c7_i32, %c0_i32_15 : i32
    %23 = arith.index_cast %22 : i32 to index
    %c0_19 = arith.constant 0 : index
    %c0_20 = arith.constant 0 : index
    %24 = vector.load %arg2[%23, %c0_19, %c0_20] : memref<8x4x128xbf16, #tpu.memory_space<vmem>>, vector<1x4x128xbf16>
    %25 = vector.shape_cast %24 : vector<1x4x128xbf16> to vector<4x128xbf16>
    %26 = arith.extf %25 : vector<4x128xbf16> to vector<4x128xf32>
    %27 = arith.addf %21, %26 : vector<4x128xf32>
    %28 = vector.extract_strided_slice %19 {offsets = [0, 0], sizes = [4, 96], strides = [1, 1]} : vector<4x128xf32> to vector<4x96xf32>
    %29 = arith.negf %28 : vector<4x96xf32>
    %30 = math.exp %29 : vector<4x96xf32>
    %cst_21 = arith.constant 1.000000e+00 : f32
    %31 = vector.broadcast %cst_21 : f32 to vector<4x96xf32>
    %32 = arith.addf %31, %30 : vector<4x96xf32>
    %33 = arith.divf %31, %32 : vector<4x96xf32>
    %34 = vector.extract_strided_slice %33 {offsets = [0, 0], sizes = [4, 32], strides = [1, 1]} : vector<4x96xf32> to vector<4x32xf32>
    %35 = vector.extract_strided_slice %33 {offsets = [0, 32], sizes = [4, 32], strides = [1, 1]} : vector<4x96xf32> to vector<4x32xf32>
    %36 = vector.extract_strided_slice %33 {offsets = [0, 64], sizes = [4, 32], strides = [1, 1]} : vector<4x96xf32> to vector<4x32xf32>
    %37 = vector.extract_strided_slice %19 {offsets = [0, 96], sizes = [4, 32], strides = [1, 1]} : vector<4x128xf32> to vector<4x32xf32>
    %38 = math.tanh %37 : vector<4x32xf32>
    %39 = arith.mulf %35, %9 : vector<4x32xf32>
    %40 = arith.mulf %34, %38 : vector<4x32xf32>
    %41 = arith.addf %39, %40 : vector<4x32xf32>
    %42 = math.tanh %41 : vector<4x32xf32>
    %43 = arith.mulf %36, %42 : vector<4x32xf32>
    %44 = vector.extract_strided_slice %27 {offsets = [0, 0], sizes = [4, 96], strides = [1, 1]} : vector<4x128xf32> to vector<4x96xf32>
    %45 = arith.negf %44 : vector<4x96xf32>
    %46 = math.exp %45 : vector<4x96xf32>
    %cst_22 = arith.constant 1.000000e+00 : f32
    %47 = vector.broadcast %cst_22 : f32 to vector<4x96xf32>
    %48 = arith.addf %47, %46 : vector<4x96xf32>
    %49 = arith.divf %47, %48 : vector<4x96xf32>
    %50 = vector.extract_strided_slice %49 {offsets = [0, 0], sizes = [4, 32], strides = [1, 1]} : vector<4x96xf32> to vector<4x32xf32>
    %51 = vector.extract_strided_slice %49 {offsets = [0, 32], sizes = [4, 32], strides = [1, 1]} : vector<4x96xf32> to vector<4x32xf32>
    %52 = vector.extract_strided_slice %49 {offsets = [0, 64], sizes = [4, 32], strides = [1, 1]} : vector<4x96xf32> to vector<4x32xf32>
    %53 = vector.extract_strided_slice %27 {offsets = [0, 96], sizes = [4, 32], strides = [1, 1]} : vector<4x128xf32> to vector<4x32xf32>
    %54 = math.tanh %53 : vector<4x32xf32>
    %55 = arith.mulf %51, %11 : vector<4x32xf32>
    %56 = arith.mulf %50, %54 : vector<4x32xf32>
    %57 = arith.addf %55, %56 : vector<4x32xf32>
    %58 = math.tanh %57 : vector<4x32xf32>
    %59 = arith.mulf %52, %58 : vector<4x32xf32>
    %60 = vector.broadcast %12 : i32 to vector<4x1xi32>
    %61 = arith.cmpi sgt, %6, %60 : vector<4x1xi32>
    %62 = vector.broadcast %12 : i32 to vector<4x1xi32>
    %63 = arith.cmpi sle, %7, %62 : vector<4x1xi32>
    %64 = vector.shape_cast %61 : vector<4x1xi1> to vector<4x1xi1>
    %65 = vector.broadcast %64 : vector<4x1xi1> to vector<4x32xi1>
    %66 = arith.select %65, %43, %8 : vector<4x32xi1>, vector<4x32xf32>
    %67 = vector.shape_cast %61 : vector<4x1xi1> to vector<4x1xi1>
    %68 = vector.broadcast %67 : vector<4x1xi1> to vector<4x32xi1>
    %69 = arith.select %68, %41, %9 : vector<4x32xi1>, vector<4x32xf32>
    %70 = vector.shape_cast %63 : vector<4x1xi1> to vector<4x1xi1>
    %71 = vector.broadcast %70 : vector<4x1xi1> to vector<4x32xi1>
    %72 = arith.select %71, %59, %10 : vector<4x32xi1>, vector<4x32xf32>
    %73 = vector.shape_cast %63 : vector<4x1xi1> to vector<4x1xi1>
    %74 = vector.broadcast %73 : vector<4x1xi1> to vector<4x32xi1>
    %75 = arith.select %74, %57, %11 : vector<4x32xi1>, vector<4x32xf32>
    %c1_i32 = arith.constant 1 : i32
    %76 = arith.addi %0, %c1_i32 : i32
    %77 = arith.truncf %66 : vector<4x32xf32> to vector<4x32xbf16>
    %cst_23 = arith.constant dense<0.000000e+00> : vector<4x128xf32>
    %78 = tpu.matmul %77, %4, %cst_23 {dimension_numbers = #tpu.dot_dimension_numbers<[1], [0], [0], [1], [0, 0, 1, 1], [], []>} : vector<4x32xbf16>, vector<32x128xbf16>, vector<4x128xf32> -> vector<4x128xf32>
    %79 = arith.index_cast %c1_i32 : i32 to index
    %c0_24 = arith.constant 0 : index
    %c0_25 = arith.constant 0 : index
    %80 = vector.load %arg1[%79, %c0_24, %c0_25] : memref<8x4x128xbf16, #tpu.memory_space<vmem>>, vector<1x4x128xbf16>
    %81 = vector.shape_cast %80 : vector<1x4x128xbf16> to vector<4x128xbf16>
    %82 = arith.extf %81 : vector<4x128xbf16> to vector<4x128xf32>
    %83 = arith.addf %78, %82 : vector<4x128xf32>
    %84 = arith.truncf %72 : vector<4x32xf32> to vector<4x32xbf16>
    %cst_26 = arith.constant dense<0.000000e+00> : vector<4x128xf32>
    %85 = tpu.matmul %84, %5, %cst_26 {dimension_numbers = #tpu.dot_dimension_numbers<[1], [0], [0], [1], [0, 0, 1, 1], [], []>} : vector<4x32xbf16>, vector<32x128xbf16>, vector<4x128xf32> -> vector<4x128xf32>
    %c7_i32_27 = arith.constant 7 : i32
    %86 = arith.subi %c7_i32_27, %c1_i32 : i32
    %87 = arith.index_cast %86 : i32 to index
    %c0_28 = arith.constant 0 : index
    %c0_29 = arith.constant 0 : index
    %88 = vector.load %arg2[%87, %c0_28, %c0_29] : memref<8x4x128xbf16, #tpu.memory_space<vmem>>, vector<1x4x128xbf16>
    %89 = vector.shape_cast %88 : vector<1x4x128xbf16> to vector<4x128xbf16>
    %90 = arith.extf %89 : vector<4x128xbf16> to vector<4x128xf32>
    %91 = arith.addf %85, %90 : vector<4x128xf32>
    %92 = vector.extract_strided_slice %83 {offsets = [0, 0], sizes = [4, 96], strides = [1, 1]} : vector<4x128xf32> to vector<4x96xf32>
    %93 = arith.negf %92 : vector<4x96xf32>
    %94 = math.exp %93 : vector<4x96xf32>
    %cst_30 = arith.constant 1.000000e+00 : f32
    %95 = vector.broadcast %cst_30 : f32 to vector<4x96xf32>
    %96 = arith.addf %95, %94 : vector<4x96xf32>
    %97 = arith.divf %95, %96 : vector<4x96xf32>
    %98 = vector.extract_strided_slice %97 {offsets = [0, 0], sizes = [4, 32], strides = [1, 1]} : vector<4x96xf32> to vector<4x32xf32>
    %99 = vector.extract_strided_slice %97 {offsets = [0, 32], sizes = [4, 32], strides = [1, 1]} : vector<4x96xf32> to vector<4x32xf32>
    %100 = vector.extract_strided_slice %97 {offsets = [0, 64], sizes = [4, 32], strides = [1, 1]} : vector<4x96xf32> to vector<4x32xf32>
    %101 = vector.extract_strided_slice %83 {offsets = [0, 96], sizes = [4, 32], strides = [1, 1]} : vector<4x128xf32> to vector<4x32xf32>
    %102 = math.tanh %101 : vector<4x32xf32>
    %103 = arith.mulf %99, %69 : vector<4x32xf32>
    %104 = arith.mulf %98, %102 : vector<4x32xf32>
    %105 = arith.addf %103, %104 : vector<4x32xf32>
    %106 = math.tanh %105 : vector<4x32xf32>
    %107 = arith.mulf %100, %106 : vector<4x32xf32>
    %108 = vector.extract_strided_slice %91 {offsets = [0, 0], sizes = [4, 96], strides = [1, 1]} : vector<4x128xf32> to vector<4x96xf32>
    %109 = arith.negf %108 : vector<4x96xf32>
    %110 = math.exp %109 : vector<4x96xf32>
    %cst_31 = arith.constant 1.000000e+00 : f32
    %111 = vector.broadcast %cst_31 : f32 to vector<4x96xf32>
    %112 = arith.addf %111, %110 : vector<4x96xf32>
    %113 = arith.divf %111, %112 : vector<4x96xf32>
    %114 = vector.extract_strided_slice %113 {offsets = [0, 0], sizes = [4, 32], strides = [1, 1]} : vector<4x96xf32> to vector<4x32xf32>
    %115 = vector.extract_strided_slice %113 {offsets = [0, 32], sizes = [4, 32], strides = [1, 1]} : vector<4x96xf32> to vector<4x32xf32>
    %116 = vector.extract_strided_slice %113 {offsets = [0, 64], sizes = [4, 32], strides = [1, 1]} : vector<4x96xf32> to vector<4x32xf32>
    %117 = vector.extract_strided_slice %91 {offsets = [0, 96], sizes = [4, 32], strides = [1, 1]} : vector<4x128xf32> to vector<4x32xf32>
    %118 = math.tanh %117 : vector<4x32xf32>
    %119 = arith.mulf %115, %75 : vector<4x32xf32>
    %120 = arith.mulf %114, %118 : vector<4x32xf32>
    %121 = arith.addf %119, %120 : vector<4x32xf32>
    %122 = math.tanh %121 : vector<4x32xf32>
    %123 = arith.mulf %116, %122 : vector<4x32xf32>
    %124 = vector.broadcast %76 : i32 to vector<4x1xi32>
    %125 = arith.cmpi sgt, %6, %124 : vector<4x1xi32>
    %126 = vector.broadcast %76 : i32 to vector<4x1xi32>
    %127 = arith.cmpi sle, %7, %126 : vector<4x1xi32>
    %128 = vector.shape_cast %125 : vector<4x1xi1> to vector<4x1xi1>
    %129 = vector.broadcast %128 : vector<4x1xi1> to vector<4x32xi1>
    %130 = arith.select %129, %107, %66 : vector<4x32xi1>, vector<4x32xf32>
    %131 = vector.shape_cast %125 : vector<4x1xi1> to vector<4x1xi1>
    %132 = vector.broadcast %131 : vector<4x1xi1> to vector<4x32xi1>
    %133 = arith.select %132, %105, %69 : vector<4x32xi1>, vector<4x32xf32>
    %134 = vector.shape_cast %127 : vector<4x1xi1> to vector<4x1xi1>
    %135 = vector.broadcast %134 : vector<4x1xi1> to vector<4x32xi1>
    %136 = arith.select %135, %123, %72 : vector<4x32xi1>, vector<4x32xf32>
    %137 = vector.shape_cast %127 : vector<4x1xi1> to vector<4x1xi1>
    %138 = vector.broadcast %137 : vector<4x1xi1> to vector<4x32xi1>
    %139 = arith.select %138, %121, %75 : vector<4x32xi1>, vector<4x32xf32>
    %c2_i32 = arith.constant 2 : i32
    %140 = arith.addi %0, %c2_i32 : i32
    %141 = arith.truncf %130 : vector<4x32xf32> to vector<4x32xbf16>
    %cst_32 = arith.constant dense<0.000000e+00> : vector<4x128xf32>
    %142 = tpu.matmul %141, %4, %cst_32 {dimension_numbers = #tpu.dot_dimension_numbers<[1], [0], [0], [1], [0, 0, 1, 1], [], []>} : vector<4x32xbf16>, vector<32x128xbf16>, vector<4x128xf32> -> vector<4x128xf32>
    %143 = arith.index_cast %c2_i32 : i32 to index
    %c0_33 = arith.constant 0 : index
    %c0_34 = arith.constant 0 : index
    %144 = vector.load %arg1[%143, %c0_33, %c0_34] : memref<8x4x128xbf16, #tpu.memory_space<vmem>>, vector<1x4x128xbf16>
    %145 = vector.shape_cast %144 : vector<1x4x128xbf16> to vector<4x128xbf16>
    %146 = arith.extf %145 : vector<4x128xbf16> to vector<4x128xf32>
    %147 = arith.addf %142, %146 : vector<4x128xf32>
    %148 = arith.truncf %136 : vector<4x32xf32> to vector<4x32xbf16>
    %cst_35 = arith.constant dense<0.000000e+00> : vector<4x128xf32>
    %149 = tpu.matmul %148, %5, %cst_35 {dimension_numbers = #tpu.dot_dimension_numbers<[1], [0], [0], [1], [0, 0, 1, 1], [], []>} : vector<4x32xbf16>, vector<32x128xbf16>, vector<4x128xf32> -> vector<4x128xf32>
    %c7_i32_36 = arith.constant 7 : i32
    %150 = arith.subi %c7_i32_36, %c2_i32 : i32
    %151 = arith.index_cast %150 : i32 to index
    %c0_37 = arith.constant 0 : index
    %c0_38 = arith.constant 0 : index
    %152 = vector.load %arg2[%151, %c0_37, %c0_38] : memref<8x4x128xbf16, #tpu.memory_space<vmem>>, vector<1x4x128xbf16>
    %153 = vector.shape_cast %152 : vector<1x4x128xbf16> to vector<4x128xbf16>
    %154 = arith.extf %153 : vector<4x128xbf16> to vector<4x128xf32>
    %155 = arith.addf %149, %154 : vector<4x128xf32>
    %156 = vector.extract_strided_slice %147 {offsets = [0, 0], sizes = [4, 96], strides = [1, 1]} : vector<4x128xf32> to vector<4x96xf32>
    %157 = arith.negf %156 : vector<4x96xf32>
    %158 = math.exp %157 : vector<4x96xf32>
    %cst_39 = arith.constant 1.000000e+00 : f32
    %159 = vector.broadcast %cst_39 : f32 to vector<4x96xf32>
    %160 = arith.addf %159, %158 : vector<4x96xf32>
    %161 = arith.divf %159, %160 : vector<4x96xf32>
    %162 = vector.extract_strided_slice %161 {offsets = [0, 0], sizes = [4, 32], strides = [1, 1]} : vector<4x96xf32> to vector<4x32xf32>
    %163 = vector.extract_strided_slice %161 {offsets = [0, 32], sizes = [4, 32], strides = [1, 1]} : vector<4x96xf32> to vector<4x32xf32>
    %164 = vector.extract_strided_slice %161 {offsets = [0, 64], sizes = [4, 32], strides = [1, 1]} : vector<4x96xf32> to vector<4x32xf32>
    %165 = vector.extract_strided_slice %147 {offsets = [0, 96], sizes = [4, 32], strides = [1, 1]} : vector<4x128xf32> to vector<4x32xf32>
    %166 = math.tanh %165 : vector<4x32xf32>
    %167 = arith.mulf %163, %133 : vector<4x32xf32>
    %168 = arith.mulf %162, %166 : vector<4x32xf32>
    %169 = arith.addf %167, %168 : vector<4x32xf32>
    %170 = math.tanh %169 : vector<4x32xf32>
    %171 = arith.mulf %164, %170 : vector<4x32xf32>
    %172 = vector.extract_strided_slice %155 {offsets = [0, 0], sizes = [4, 96], strides = [1, 1]} : vector<4x128xf32> to vector<4x96xf32>
    %173 = arith.negf %172 : vector<4x96xf32>
    %174 = math.exp %173 : vector<4x96xf32>
    %cst_40 = arith.constant 1.000000e+00 : f32
    %175 = vector.broadcast %cst_40 : f32 to vector<4x96xf32>
    %176 = arith.addf %175, %174 : vector<4x96xf32>
    %177 = arith.divf %175, %176 : vector<4x96xf32>
    %178 = vector.extract_strided_slice %177 {offsets = [0, 0], sizes = [4, 32], strides = [1, 1]} : vector<4x96xf32> to vector<4x32xf32>
    %179 = vector.extract_strided_slice %177 {offsets = [0, 32], sizes = [4, 32], strides = [1, 1]} : vector<4x96xf32> to vector<4x32xf32>
    %180 = vector.extract_strided_slice %177 {offsets = [0, 64], sizes = [4, 32], strides = [1, 1]} : vector<4x96xf32> to vector<4x32xf32>
    %181 = vector.extract_strided_slice %155 {offsets = [0, 96], sizes = [4, 32], strides = [1, 1]} : vector<4x128xf32> to vector<4x32xf32>
    %182 = math.tanh %181 : vector<4x32xf32>
    %183 = arith.mulf %179, %139 : vector<4x32xf32>
    %184 = arith.mulf %178, %182 : vector<4x32xf32>
    %185 = arith.addf %183, %184 : vector<4x32xf32>
    %186 = math.tanh %185 : vector<4x32xf32>
    %187 = arith.mulf %180, %186 : vector<4x32xf32>
    %188 = vector.broadcast %140 : i32 to vector<4x1xi32>
    %189 = arith.cmpi sgt, %6, %188 : vector<4x1xi32>
    %190 = vector.broadcast %140 : i32 to vector<4x1xi32>
    %191 = arith.cmpi sle, %7, %190 : vector<4x1xi32>
    %192 = vector.shape_cast %189 : vector<4x1xi1> to vector<4x1xi1>
    %193 = vector.broadcast %192 : vector<4x1xi1> to vector<4x32xi1>
    %194 = arith.select %193, %171, %130 : vector<4x32xi1>, vector<4x32xf32>
    %195 = vector.shape_cast %189 : vector<4x1xi1> to vector<4x1xi1>
    %196 = vector.broadcast %195 : vector<4x1xi1> to vector<4x32xi1>
    %197 = arith.select %196, %169, %133 : vector<4x32xi1>, vector<4x32xf32>
    %198 = vector.shape_cast %191 : vector<4x1xi1> to vector<4x1xi1>
    %199 = vector.broadcast %198 : vector<4x1xi1> to vector<4x32xi1>
    %200 = arith.select %199, %187, %136 : vector<4x32xi1>, vector<4x32xf32>
    %201 = vector.shape_cast %191 : vector<4x1xi1> to vector<4x1xi1>
    %202 = vector.broadcast %201 : vector<4x1xi1> to vector<4x32xi1>
    %203 = arith.select %202, %185, %139 : vector<4x32xi1>, vector<4x32xf32>
    %c3_i32 = arith.constant 3 : i32
    %204 = arith.addi %0, %c3_i32 : i32
    %205 = arith.truncf %194 : vector<4x32xf32> to vector<4x32xbf16>
    %cst_41 = arith.constant dense<0.000000e+00> : vector<4x128xf32>
    %206 = tpu.matmul %205, %4, %cst_41 {dimension_numbers = #tpu.dot_dimension_numbers<[1], [0], [0], [1], [0, 0, 1, 1], [], []>} : vector<4x32xbf16>, vector<32x128xbf16>, vector<4x128xf32> -> vector<4x128xf32>
    %207 = arith.index_cast %c3_i32 : i32 to index
    %c0_42 = arith.constant 0 : index
    %c0_43 = arith.constant 0 : index
    %208 = vector.load %arg1[%207, %c0_42, %c0_43] : memref<8x4x128xbf16, #tpu.memory_space<vmem>>, vector<1x4x128xbf16>
    %209 = vector.shape_cast %208 : vector<1x4x128xbf16> to vector<4x128xbf16>
    %210 = arith.extf %209 : vector<4x128xbf16> to vector<4x128xf32>
    %211 = arith.addf %206, %210 : vector<4x128xf32>
    %212 = arith.truncf %200 : vector<4x32xf32> to vector<4x32xbf16>
    %cst_44 = arith.constant dense<0.000000e+00> : vector<4x128xf32>
    %213 = tpu.matmul %212, %5, %cst_44 {dimension_numbers = #tpu.dot_dimension_numbers<[1], [0], [0], [1], [0, 0, 1, 1], [], []>} : vector<4x32xbf16>, vector<32x128xbf16>, vector<4x128xf32> -> vector<4x128xf32>
    %c7_i32_45 = arith.constant 7 : i32
    %214 = arith.subi %c7_i32_45, %c3_i32 : i32
    %215 = arith.index_cast %214 : i32 to index
    %c0_46 = arith.constant 0 : index
    %c0_47 = arith.constant 0 : index
    %216 = vector.load %arg2[%215, %c0_46, %c0_47] : memref<8x4x128xbf16, #tpu.memory_space<vmem>>, vector<1x4x128xbf16>
    %217 = vector.shape_cast %216 : vector<1x4x128xbf16> to vector<4x128xbf16>
    %218 = arith.extf %217 : vector<4x128xbf16> to vector<4x128xf32>
    %219 = arith.addf %213, %218 : vector<4x128xf32>
    %220 = vector.extract_strided_slice %211 {offsets = [0, 0], sizes = [4, 96], strides = [1, 1]} : vector<4x128xf32> to vector<4x96xf32>
    %221 = arith.negf %220 : vector<4x96xf32>
    %222 = math.exp %221 : vector<4x96xf32>
    %cst_48 = arith.constant 1.000000e+00 : f32
    %223 = vector.broadcast %cst_48 : f32 to vector<4x96xf32>
    %224 = arith.addf %223, %222 : vector<4x96xf32>
    %225 = arith.divf %223, %224 : vector<4x96xf32>
    %226 = vector.extract_strided_slice %225 {offsets = [0, 0], sizes = [4, 32], strides = [1, 1]} : vector<4x96xf32> to vector<4x32xf32>
    %227 = vector.extract_strided_slice %225 {offsets = [0, 32], sizes = [4, 32], strides = [1, 1]} : vector<4x96xf32> to vector<4x32xf32>
    %228 = vector.extract_strided_slice %225 {offsets = [0, 64], sizes = [4, 32], strides = [1, 1]} : vector<4x96xf32> to vector<4x32xf32>
    %229 = vector.extract_strided_slice %211 {offsets = [0, 96], sizes = [4, 32], strides = [1, 1]} : vector<4x128xf32> to vector<4x32xf32>
    %230 = math.tanh %229 : vector<4x32xf32>
    %231 = arith.mulf %227, %197 : vector<4x32xf32>
    %232 = arith.mulf %226, %230 : vector<4x32xf32>
    %233 = arith.addf %231, %232 : vector<4x32xf32>
    %234 = math.tanh %233 : vector<4x32xf32>
    %235 = arith.mulf %228, %234 : vector<4x32xf32>
    %236 = vector.extract_strided_slice %219 {offsets = [0, 0], sizes = [4, 96], strides = [1, 1]} : vector<4x128xf32> to vector<4x96xf32>
    %237 = arith.negf %236 : vector<4x96xf32>
    %238 = math.exp %237 : vector<4x96xf32>
    %cst_49 = arith.constant 1.000000e+00 : f32
    %239 = vector.broadcast %cst_49 : f32 to vector<4x96xf32>
    %240 = arith.addf %239, %238 : vector<4x96xf32>
    %241 = arith.divf %239, %240 : vector<4x96xf32>
    %242 = vector.extract_strided_slice %241 {offsets = [0, 0], sizes = [4, 32], strides = [1, 1]} : vector<4x96xf32> to vector<4x32xf32>
    %243 = vector.extract_strided_slice %241 {offsets = [0, 32], sizes = [4, 32], strides = [1, 1]} : vector<4x96xf32> to vector<4x32xf32>
    %244 = vector.extract_strided_slice %241 {offsets = [0, 64], sizes = [4, 32], strides = [1, 1]} : vector<4x96xf32> to vector<4x32xf32>
    %245 = vector.extract_strided_slice %219 {offsets = [0, 96], sizes = [4, 32], strides = [1, 1]} : vector<4x128xf32> to vector<4x32xf32>
    %246 = math.tanh %245 : vector<4x32xf32>
    %247 = arith.mulf %243, %203 : vector<4x32xf32>
    %248 = arith.mulf %242, %246 : vector<4x32xf32>
    %249 = arith.addf %247, %248 : vector<4x32xf32>
    %250 = math.tanh %249 : vector<4x32xf32>
    %251 = arith.mulf %244, %250 : vector<4x32xf32>
    %252 = vector.broadcast %204 : i32 to vector<4x1xi32>
    %253 = arith.cmpi sgt, %6, %252 : vector<4x1xi32>
    %254 = vector.broadcast %204 : i32 to vector<4x1xi32>
    %255 = arith.cmpi sle, %7, %254 : vector<4x1xi32>
    %256 = vector.shape_cast %253 : vector<4x1xi1> to vector<4x1xi1>
    %257 = vector.broadcast %256 : vector<4x1xi1> to vector<4x32xi1>
    %258 = arith.select %257, %235, %194 : vector<4x32xi1>, vector<4x32xf32>
    %259 = vector.shape_cast %253 : vector<4x1xi1> to vector<4x1xi1>
    %260 = vector.broadcast %259 : vector<4x1xi1> to vector<4x32xi1>
    %261 = arith.select %260, %233, %197 : vector<4x32xi1>, vector<4x32xf32>
    %262 = vector.shape_cast %255 : vector<4x1xi1> to vector<4x1xi1>
    %263 = vector.broadcast %262 : vector<4x1xi1> to vector<4x32xi1>
    %264 = arith.select %263, %251, %200 : vector<4x32xi1>, vector<4x32xf32>
    %265 = vector.shape_cast %255 : vector<4x1xi1> to vector<4x1xi1>
    %266 = vector.broadcast %265 : vector<4x1xi1> to vector<4x32xi1>
    %267 = arith.select %266, %249, %203 : vector<4x32xi1>, vector<4x32xf32>
    %c4_i32 = arith.constant 4 : i32
    %268 = arith.addi %0, %c4_i32 : i32
    %269 = arith.truncf %258 : vector<4x32xf32> to vector<4x32xbf16>
    %cst_50 = arith.constant dense<0.000000e+00> : vector<4x128xf32>
    %270 = tpu.matmul %269, %4, %cst_50 {dimension_numbers = #tpu.dot_dimension_numbers<[1], [0], [0], [1], [0, 0, 1, 1], [], []>} : vector<4x32xbf16>, vector<32x128xbf16>, vector<4x128xf32> -> vector<4x128xf32>
    %271 = arith.index_cast %c4_i32 : i32 to index
    %c0_51 = arith.constant 0 : index
    %c0_52 = arith.constant 0 : index
    %272 = vector.load %arg1[%271, %c0_51, %c0_52] : memref<8x4x128xbf16, #tpu.memory_space<vmem>>, vector<1x4x128xbf16>
    %273 = vector.shape_cast %272 : vector<1x4x128xbf16> to vector<4x128xbf16>
    %274 = arith.extf %273 : vector<4x128xbf16> to vector<4x128xf32>
    %275 = arith.addf %270, %274 : vector<4x128xf32>
    %276 = arith.truncf %264 : vector<4x32xf32> to vector<4x32xbf16>
    %cst_53 = arith.constant dense<0.000000e+00> : vector<4x128xf32>
    %277 = tpu.matmul %276, %5, %cst_53 {dimension_numbers = #tpu.dot_dimension_numbers<[1], [0], [0], [1], [0, 0, 1, 1], [], []>} : vector<4x32xbf16>, vector<32x128xbf16>, vector<4x128xf32> -> vector<4x128xf32>
    %c7_i32_54 = arith.constant 7 : i32
    %278 = arith.subi %c7_i32_54, %c4_i32 : i32
    %279 = arith.index_cast %278 : i32 to index
    %c0_55 = arith.constant 0 : index
    %c0_56 = arith.constant 0 : index
    %280 = vector.load %arg2[%279, %c0_55, %c0_56] : memref<8x4x128xbf16, #tpu.memory_space<vmem>>, vector<1x4x128xbf16>
    %281 = vector.shape_cast %280 : vector<1x4x128xbf16> to vector<4x128xbf16>
    %282 = arith.extf %281 : vector<4x128xbf16> to vector<4x128xf32>
    %283 = arith.addf %277, %282 : vector<4x128xf32>
    %284 = vector.extract_strided_slice %275 {offsets = [0, 0], sizes = [4, 96], strides = [1, 1]} : vector<4x128xf32> to vector<4x96xf32>
    %285 = arith.negf %284 : vector<4x96xf32>
    %286 = math.exp %285 : vector<4x96xf32>
    %cst_57 = arith.constant 1.000000e+00 : f32
    %287 = vector.broadcast %cst_57 : f32 to vector<4x96xf32>
    %288 = arith.addf %287, %286 : vector<4x96xf32>
    %289 = arith.divf %287, %288 : vector<4x96xf32>
    %290 = vector.extract_strided_slice %289 {offsets = [0, 0], sizes = [4, 32], strides = [1, 1]} : vector<4x96xf32> to vector<4x32xf32>
    %291 = vector.extract_strided_slice %289 {offsets = [0, 32], sizes = [4, 32], strides = [1, 1]} : vector<4x96xf32> to vector<4x32xf32>
    %292 = vector.extract_strided_slice %289 {offsets = [0, 64], sizes = [4, 32], strides = [1, 1]} : vector<4x96xf32> to vector<4x32xf32>
    %293 = vector.extract_strided_slice %275 {offsets = [0, 96], sizes = [4, 32], strides = [1, 1]} : vector<4x128xf32> to vector<4x32xf32>
    %294 = math.tanh %293 : vector<4x32xf32>
    %295 = arith.mulf %291, %261 : vector<4x32xf32>
    %296 = arith.mulf %290, %294 : vector<4x32xf32>
    %297 = arith.addf %295, %296 : vector<4x32xf32>
    %298 = math.tanh %297 : vector<4x32xf32>
    %299 = arith.mulf %292, %298 : vector<4x32xf32>
    %300 = vector.extract_strided_slice %283 {offsets = [0, 0], sizes = [4, 96], strides = [1, 1]} : vector<4x128xf32> to vector<4x96xf32>
    %301 = arith.negf %300 : vector<4x96xf32>
    %302 = math.exp %301 : vector<4x96xf32>
    %cst_58 = arith.constant 1.000000e+00 : f32
    %303 = vector.broadcast %cst_58 : f32 to vector<4x96xf32>
    %304 = arith.addf %303, %302 : vector<4x96xf32>
    %305 = arith.divf %303, %304 : vector<4x96xf32>
    %306 = vector.extract_strided_slice %305 {offsets = [0, 0], sizes = [4, 32], strides = [1, 1]} : vector<4x96xf32> to vector<4x32xf32>
    %307 = vector.extract_strided_slice %305 {offsets = [0, 32], sizes = [4, 32], strides = [1, 1]} : vector<4x96xf32> to vector<4x32xf32>
    %308 = vector.extract_strided_slice %305 {offsets = [0, 64], sizes = [4, 32], strides = [1, 1]} : vector<4x96xf32> to vector<4x32xf32>
    %309 = vector.extract_strided_slice %283 {offsets = [0, 96], sizes = [4, 32], strides = [1, 1]} : vector<4x128xf32> to vector<4x32xf32>
    %310 = math.tanh %309 : vector<4x32xf32>
    %311 = arith.mulf %307, %267 : vector<4x32xf32>
    %312 = arith.mulf %306, %310 : vector<4x32xf32>
    %313 = arith.addf %311, %312 : vector<4x32xf32>
    %314 = math.tanh %313 : vector<4x32xf32>
    %315 = arith.mulf %308, %314 : vector<4x32xf32>
    %316 = vector.broadcast %268 : i32 to vector<4x1xi32>
    %317 = arith.cmpi sgt, %6, %316 : vector<4x1xi32>
    %318 = vector.broadcast %268 : i32 to vector<4x1xi32>
    %319 = arith.cmpi sle, %7, %318 : vector<4x1xi32>
    %320 = vector.shape_cast %317 : vector<4x1xi1> to vector<4x1xi1>
    %321 = vector.broadcast %320 : vector<4x1xi1> to vector<4x32xi1>
    %322 = arith.select %321, %299, %258 : vector<4x32xi1>, vector<4x32xf32>
    %323 = vector.shape_cast %317 : vector<4x1xi1> to vector<4x1xi1>
    %324 = vector.broadcast %323 : vector<4x1xi1> to vector<4x32xi1>
    %325 = arith.select %324, %297, %261 : vector<4x32xi1>, vector<4x32xf32>
    %326 = vector.shape_cast %319 : vector<4x1xi1> to vector<4x1xi1>
    %327 = vector.broadcast %326 : vector<4x1xi1> to vector<4x32xi1>
    %328 = arith.select %327, %315, %264 : vector<4x32xi1>, vector<4x32xf32>
    %329 = vector.shape_cast %319 : vector<4x1xi1> to vector<4x1xi1>
    %330 = vector.broadcast %329 : vector<4x1xi1> to vector<4x32xi1>
    %331 = arith.select %330, %313, %267 : vector<4x32xi1>, vector<4x32xf32>
    %c5_i32 = arith.constant 5 : i32
    %332 = arith.addi %0, %c5_i32 : i32
    %333 = arith.truncf %322 : vector<4x32xf32> to vector<4x32xbf16>
    %cst_59 = arith.constant dense<0.000000e+00> : vector<4x128xf32>
    %334 = tpu.matmul %333, %4, %cst_59 {dimension_numbers = #tpu.dot_dimension_numbers<[1], [0], [0], [1], [0, 0, 1, 1], [], []>} : vector<4x32xbf16>, vector<32x128xbf16>, vector<4x128xf32> -> vector<4x128xf32>
    %335 = arith.index_cast %c5_i32 : i32 to index
    %c0_60 = arith.constant 0 : index
    %c0_61 = arith.constant 0 : index
    %336 = vector.load %arg1[%335, %c0_60, %c0_61] : memref<8x4x128xbf16, #tpu.memory_space<vmem>>, vector<1x4x128xbf16>
    %337 = vector.shape_cast %336 : vector<1x4x128xbf16> to vector<4x128xbf16>
    %338 = arith.extf %337 : vector<4x128xbf16> to vector<4x128xf32>
    %339 = arith.addf %334, %338 : vector<4x128xf32>
    %340 = arith.truncf %328 : vector<4x32xf32> to vector<4x32xbf16>
    %cst_62 = arith.constant dense<0.000000e+00> : vector<4x128xf32>
    %341 = tpu.matmul %340, %5, %cst_62 {dimension_numbers = #tpu.dot_dimension_numbers<[1], [0], [0], [1], [0, 0, 1, 1], [], []>} : vector<4x32xbf16>, vector<32x128xbf16>, vector<4x128xf32> -> vector<4x128xf32>
    %c7_i32_63 = arith.constant 7 : i32
    %342 = arith.subi %c7_i32_63, %c5_i32 : i32
    %343 = arith.index_cast %342 : i32 to index
    %c0_64 = arith.constant 0 : index
    %c0_65 = arith.constant 0 : index
    %344 = vector.load %arg2[%343, %c0_64, %c0_65] : memref<8x4x128xbf16, #tpu.memory_space<vmem>>, vector<1x4x128xbf16>
    %345 = vector.shape_cast %344 : vector<1x4x128xbf16> to vector<4x128xbf16>
    %346 = arith.extf %345 : vector<4x128xbf16> to vector<4x128xf32>
    %347 = arith.addf %341, %346 : vector<4x128xf32>
    %348 = vector.extract_strided_slice %339 {offsets = [0, 0], sizes = [4, 96], strides = [1, 1]} : vector<4x128xf32> to vector<4x96xf32>
    %349 = arith.negf %348 : vector<4x96xf32>
    %350 = math.exp %349 : vector<4x96xf32>
    %cst_66 = arith.constant 1.000000e+00 : f32
    %351 = vector.broadcast %cst_66 : f32 to vector<4x96xf32>
    %352 = arith.addf %351, %350 : vector<4x96xf32>
    %353 = arith.divf %351, %352 : vector<4x96xf32>
    %354 = vector.extract_strided_slice %353 {offsets = [0, 0], sizes = [4, 32], strides = [1, 1]} : vector<4x96xf32> to vector<4x32xf32>
    %355 = vector.extract_strided_slice %353 {offsets = [0, 32], sizes = [4, 32], strides = [1, 1]} : vector<4x96xf32> to vector<4x32xf32>
    %356 = vector.extract_strided_slice %353 {offsets = [0, 64], sizes = [4, 32], strides = [1, 1]} : vector<4x96xf32> to vector<4x32xf32>
    %357 = vector.extract_strided_slice %339 {offsets = [0, 96], sizes = [4, 32], strides = [1, 1]} : vector<4x128xf32> to vector<4x32xf32>
    %358 = math.tanh %357 : vector<4x32xf32>
    %359 = arith.mulf %355, %325 : vector<4x32xf32>
    %360 = arith.mulf %354, %358 : vector<4x32xf32>
    %361 = arith.addf %359, %360 : vector<4x32xf32>
    %362 = math.tanh %361 : vector<4x32xf32>
    %363 = arith.mulf %356, %362 : vector<4x32xf32>
    %364 = vector.extract_strided_slice %347 {offsets = [0, 0], sizes = [4, 96], strides = [1, 1]} : vector<4x128xf32> to vector<4x96xf32>
    %365 = arith.negf %364 : vector<4x96xf32>
    %366 = math.exp %365 : vector<4x96xf32>
    %cst_67 = arith.constant 1.000000e+00 : f32
    %367 = vector.broadcast %cst_67 : f32 to vector<4x96xf32>
    %368 = arith.addf %367, %366 : vector<4x96xf32>
    %369 = arith.divf %367, %368 : vector<4x96xf32>
    %370 = vector.extract_strided_slice %369 {offsets = [0, 0], sizes = [4, 32], strides = [1, 1]} : vector<4x96xf32> to vector<4x32xf32>
    %371 = vector.extract_strided_slice %369 {offsets = [0, 32], sizes = [4, 32], strides = [1, 1]} : vector<4x96xf32> to vector<4x32xf32>
    %372 = vector.extract_strided_slice %369 {offsets = [0, 64], sizes = [4, 32], strides = [1, 1]} : vector<4x96xf32> to vector<4x32xf32>
    %373 = vector.extract_strided_slice %347 {offsets = [0, 96], sizes = [4, 32], strides = [1, 1]} : vector<4x128xf32> to vector<4x32xf32>
    %374 = math.tanh %373 : vector<4x32xf32>
    %375 = arith.mulf %371, %331 : vector<4x32xf32>
    %376 = arith.mulf %370, %374 : vector<4x32xf32>
    %377 = arith.addf %375, %376 : vector<4x32xf32>
    %378 = math.tanh %377 : vector<4x32xf32>
    %379 = arith.mulf %372, %378 : vector<4x32xf32>
    %380 = vector.broadcast %332 : i32 to vector<4x1xi32>
    %381 = arith.cmpi sgt, %6, %380 : vector<4x1xi32>
    %382 = vector.broadcast %332 : i32 to vector<4x1xi32>
    %383 = arith.cmpi sle, %7, %382 : vector<4x1xi32>
    %384 = vector.shape_cast %381 : vector<4x1xi1> to vector<4x1xi1>
    %385 = vector.broadcast %384 : vector<4x1xi1> to vector<4x32xi1>
    %386 = arith.select %385, %363, %322 : vector<4x32xi1>, vector<4x32xf32>
    %387 = vector.shape_cast %381 : vector<4x1xi1> to vector<4x1xi1>
    %388 = vector.broadcast %387 : vector<4x1xi1> to vector<4x32xi1>
    %389 = arith.select %388, %361, %325 : vector<4x32xi1>, vector<4x32xf32>
    %390 = vector.shape_cast %383 : vector<4x1xi1> to vector<4x1xi1>
    %391 = vector.broadcast %390 : vector<4x1xi1> to vector<4x32xi1>
    %392 = arith.select %391, %379, %328 : vector<4x32xi1>, vector<4x32xf32>
    %393 = vector.shape_cast %383 : vector<4x1xi1> to vector<4x1xi1>
    %394 = vector.broadcast %393 : vector<4x1xi1> to vector<4x32xi1>
    %395 = arith.select %394, %377, %331 : vector<4x32xi1>, vector<4x32xf32>
    %c6_i32 = arith.constant 6 : i32
    %396 = arith.addi %0, %c6_i32 : i32
    %397 = arith.truncf %386 : vector<4x32xf32> to vector<4x32xbf16>
    %cst_68 = arith.constant dense<0.000000e+00> : vector<4x128xf32>
    %398 = tpu.matmul %397, %4, %cst_68 {dimension_numbers = #tpu.dot_dimension_numbers<[1], [0], [0], [1], [0, 0, 1, 1], [], []>} : vector<4x32xbf16>, vector<32x128xbf16>, vector<4x128xf32> -> vector<4x128xf32>
    %399 = arith.index_cast %c6_i32 : i32 to index
    %c0_69 = arith.constant 0 : index
    %c0_70 = arith.constant 0 : index
    %400 = vector.load %arg1[%399, %c0_69, %c0_70] : memref<8x4x128xbf16, #tpu.memory_space<vmem>>, vector<1x4x128xbf16>
    %401 = vector.shape_cast %400 : vector<1x4x128xbf16> to vector<4x128xbf16>
    %402 = arith.extf %401 : vector<4x128xbf16> to vector<4x128xf32>
    %403 = arith.addf %398, %402 : vector<4x128xf32>
    %404 = arith.truncf %392 : vector<4x32xf32> to vector<4x32xbf16>
    %cst_71 = arith.constant dense<0.000000e+00> : vector<4x128xf32>
    %405 = tpu.matmul %404, %5, %cst_71 {dimension_numbers = #tpu.dot_dimension_numbers<[1], [0], [0], [1], [0, 0, 1, 1], [], []>} : vector<4x32xbf16>, vector<32x128xbf16>, vector<4x128xf32> -> vector<4x128xf32>
    %c7_i32_72 = arith.constant 7 : i32
    %406 = arith.subi %c7_i32_72, %c6_i32 : i32
    %407 = arith.index_cast %406 : i32 to index
    %c0_73 = arith.constant 0 : index
    %c0_74 = arith.constant 0 : index
    %408 = vector.load %arg2[%407, %c0_73, %c0_74] : memref<8x4x128xbf16, #tpu.memory_space<vmem>>, vector<1x4x128xbf16>
    %409 = vector.shape_cast %408 : vector<1x4x128xbf16> to vector<4x128xbf16>
    %410 = arith.extf %409 : vector<4x128xbf16> to vector<4x128xf32>
    %411 = arith.addf %405, %410 : vector<4x128xf32>
    %412 = vector.extract_strided_slice %403 {offsets = [0, 0], sizes = [4, 96], strides = [1, 1]} : vector<4x128xf32> to vector<4x96xf32>
    %413 = arith.negf %412 : vector<4x96xf32>
    %414 = math.exp %413 : vector<4x96xf32>
    %cst_75 = arith.constant 1.000000e+00 : f32
    %415 = vector.broadcast %cst_75 : f32 to vector<4x96xf32>
    %416 = arith.addf %415, %414 : vector<4x96xf32>
    %417 = arith.divf %415, %416 : vector<4x96xf32>
    %418 = vector.extract_strided_slice %417 {offsets = [0, 0], sizes = [4, 32], strides = [1, 1]} : vector<4x96xf32> to vector<4x32xf32>
    %419 = vector.extract_strided_slice %417 {offsets = [0, 32], sizes = [4, 32], strides = [1, 1]} : vector<4x96xf32> to vector<4x32xf32>
    %420 = vector.extract_strided_slice %417 {offsets = [0, 64], sizes = [4, 32], strides = [1, 1]} : vector<4x96xf32> to vector<4x32xf32>
    %421 = vector.extract_strided_slice %403 {offsets = [0, 96], sizes = [4, 32], strides = [1, 1]} : vector<4x128xf32> to vector<4x32xf32>
    %422 = math.tanh %421 : vector<4x32xf32>
    %423 = arith.mulf %419, %389 : vector<4x32xf32>
    %424 = arith.mulf %418, %422 : vector<4x32xf32>
    %425 = arith.addf %423, %424 : vector<4x32xf32>
    %426 = math.tanh %425 : vector<4x32xf32>
    %427 = arith.mulf %420, %426 : vector<4x32xf32>
    %428 = vector.extract_strided_slice %411 {offsets = [0, 0], sizes = [4, 96], strides = [1, 1]} : vector<4x128xf32> to vector<4x96xf32>
    %429 = arith.negf %428 : vector<4x96xf32>
    %430 = math.exp %429 : vector<4x96xf32>
    %cst_76 = arith.constant 1.000000e+00 : f32
    %431 = vector.broadcast %cst_76 : f32 to vector<4x96xf32>
    %432 = arith.addf %431, %430 : vector<4x96xf32>
    %433 = arith.divf %431, %432 : vector<4x96xf32>
    %434 = vector.extract_strided_slice %433 {offsets = [0, 0], sizes = [4, 32], strides = [1, 1]} : vector<4x96xf32> to vector<4x32xf32>
    %435 = vector.extract_strided_slice %433 {offsets = [0, 32], sizes = [4, 32], strides = [1, 1]} : vector<4x96xf32> to vector<4x32xf32>
    %436 = vector.extract_strided_slice %433 {offsets = [0, 64], sizes = [4, 32], strides = [1, 1]} : vector<4x96xf32> to vector<4x32xf32>
    %437 = vector.extract_strided_slice %411 {offsets = [0, 96], sizes = [4, 32], strides = [1, 1]} : vector<4x128xf32> to vector<4x32xf32>
    %438 = math.tanh %437 : vector<4x32xf32>
    %439 = arith.mulf %435, %395 : vector<4x32xf32>
    %440 = arith.mulf %434, %438 : vector<4x32xf32>
    %441 = arith.addf %439, %440 : vector<4x32xf32>
    %442 = math.tanh %441 : vector<4x32xf32>
    %443 = arith.mulf %436, %442 : vector<4x32xf32>
    %444 = vector.broadcast %396 : i32 to vector<4x1xi32>
    %445 = arith.cmpi sgt, %6, %444 : vector<4x1xi32>
    %446 = vector.broadcast %396 : i32 to vector<4x1xi32>
    %447 = arith.cmpi sle, %7, %446 : vector<4x1xi32>
    %448 = vector.shape_cast %445 : vector<4x1xi1> to vector<4x1xi1>
    %449 = vector.broadcast %448 : vector<4x1xi1> to vector<4x32xi1>
    %450 = arith.select %449, %427, %386 : vector<4x32xi1>, vector<4x32xf32>
    %451 = vector.shape_cast %445 : vector<4x1xi1> to vector<4x1xi1>
    %452 = vector.broadcast %451 : vector<4x1xi1> to vector<4x32xi1>
    %453 = arith.select %452, %425, %389 : vector<4x32xi1>, vector<4x32xf32>
    %454 = vector.shape_cast %447 : vector<4x1xi1> to vector<4x1xi1>
    %455 = vector.broadcast %454 : vector<4x1xi1> to vector<4x32xi1>
    %456 = arith.select %455, %443, %392 : vector<4x32xi1>, vector<4x32xf32>
    %457 = vector.shape_cast %447 : vector<4x1xi1> to vector<4x1xi1>
    %458 = vector.broadcast %457 : vector<4x1xi1> to vector<4x32xi1>
    %459 = arith.select %458, %441, %395 : vector<4x32xi1>, vector<4x32xf32>
    %c7_i32_77 = arith.constant 7 : i32
    %460 = arith.addi %0, %c7_i32_77 : i32
    %461 = arith.truncf %450 : vector<4x32xf32> to vector<4x32xbf16>
    %cst_78 = arith.constant dense<0.000000e+00> : vector<4x128xf32>
    %462 = tpu.matmul %461, %4, %cst_78 {dimension_numbers = #tpu.dot_dimension_numbers<[1], [0], [0], [1], [0, 0, 1, 1], [], []>} : vector<4x32xbf16>, vector<32x128xbf16>, vector<4x128xf32> -> vector<4x128xf32>
    %463 = arith.index_cast %c7_i32_77 : i32 to index
    %c0_79 = arith.constant 0 : index
    %c0_80 = arith.constant 0 : index
    %464 = vector.load %arg1[%463, %c0_79, %c0_80] : memref<8x4x128xbf16, #tpu.memory_space<vmem>>, vector<1x4x128xbf16>
    %465 = vector.shape_cast %464 : vector<1x4x128xbf16> to vector<4x128xbf16>
    %466 = arith.extf %465 : vector<4x128xbf16> to vector<4x128xf32>
    %467 = arith.addf %462, %466 : vector<4x128xf32>
    %468 = arith.truncf %456 : vector<4x32xf32> to vector<4x32xbf16>
    %cst_81 = arith.constant dense<0.000000e+00> : vector<4x128xf32>
    %469 = tpu.matmul %468, %5, %cst_81 {dimension_numbers = #tpu.dot_dimension_numbers<[1], [0], [0], [1], [0, 0, 1, 1], [], []>} : vector<4x32xbf16>, vector<32x128xbf16>, vector<4x128xf32> -> vector<4x128xf32>
    %c7_i32_82 = arith.constant 7 : i32
    %470 = arith.subi %c7_i32_82, %c7_i32_77 : i32
    %471 = arith.index_cast %470 : i32 to index
    %c0_83 = arith.constant 0 : index
    %c0_84 = arith.constant 0 : index
    %472 = vector.load %arg2[%471, %c0_83, %c0_84] : memref<8x4x128xbf16, #tpu.memory_space<vmem>>, vector<1x4x128xbf16>
    %473 = vector.shape_cast %472 : vector<1x4x128xbf16> to vector<4x128xbf16>
    %474 = arith.extf %473 : vector<4x128xbf16> to vector<4x128xf32>
    %475 = arith.addf %469, %474 : vector<4x128xf32>
    %476 = vector.extract_strided_slice %467 {offsets = [0, 0], sizes = [4, 96], strides = [1, 1]} : vector<4x128xf32> to vector<4x96xf32>
    %477 = arith.negf %476 : vector<4x96xf32>
    %478 = math.exp %477 : vector<4x96xf32>
    %cst_85 = arith.constant 1.000000e+00 : f32
    %479 = vector.broadcast %cst_85 : f32 to vector<4x96xf32>
    %480 = arith.addf %479, %478 : vector<4x96xf32>
    %481 = arith.divf %479, %480 : vector<4x96xf32>
    %482 = vector.extract_strided_slice %481 {offsets = [0, 0], sizes = [4, 32], strides = [1, 1]} : vector<4x96xf32> to vector<4x32xf32>
    %483 = vector.extract_strided_slice %481 {offsets = [0, 32], sizes = [4, 32], strides = [1, 1]} : vector<4x96xf32> to vector<4x32xf32>
    %484 = vector.extract_strided_slice %481 {offsets = [0, 64], sizes = [4, 32], strides = [1, 1]} : vector<4x96xf32> to vector<4x32xf32>
    %485 = vector.extract_strided_slice %467 {offsets = [0, 96], sizes = [4, 32], strides = [1, 1]} : vector<4x128xf32> to vector<4x32xf32>
    %486 = math.tanh %485 : vector<4x32xf32>
    %487 = arith.mulf %483, %453 : vector<4x32xf32>
    %488 = arith.mulf %482, %486 : vector<4x32xf32>
    %489 = arith.addf %487, %488 : vector<4x32xf32>
    %490 = math.tanh %489 : vector<4x32xf32>
    %491 = arith.mulf %484, %490 : vector<4x32xf32>
    %492 = vector.extract_strided_slice %475 {offsets = [0, 0], sizes = [4, 96], strides = [1, 1]} : vector<4x128xf32> to vector<4x96xf32>
    %493 = arith.negf %492 : vector<4x96xf32>
    %494 = math.exp %493 : vector<4x96xf32>
    %cst_86 = arith.constant 1.000000e+00 : f32
    %495 = vector.broadcast %cst_86 : f32 to vector<4x96xf32>
    %496 = arith.addf %495, %494 : vector<4x96xf32>
    %497 = arith.divf %495, %496 : vector<4x96xf32>
    %498 = vector.extract_strided_slice %497 {offsets = [0, 0], sizes = [4, 32], strides = [1, 1]} : vector<4x96xf32> to vector<4x32xf32>
    %499 = vector.extract_strided_slice %497 {offsets = [0, 32], sizes = [4, 32], strides = [1, 1]} : vector<4x96xf32> to vector<4x32xf32>
    %500 = vector.extract_strided_slice %497 {offsets = [0, 64], sizes = [4, 32], strides = [1, 1]} : vector<4x96xf32> to vector<4x32xf32>
    %501 = vector.extract_strided_slice %475 {offsets = [0, 96], sizes = [4, 32], strides = [1, 1]} : vector<4x128xf32> to vector<4x32xf32>
    %502 = math.tanh %501 : vector<4x32xf32>
    %503 = arith.mulf %499, %459 : vector<4x32xf32>
    %504 = arith.mulf %498, %502 : vector<4x32xf32>
    %505 = arith.addf %503, %504 : vector<4x32xf32>
    %506 = math.tanh %505 : vector<4x32xf32>
    %507 = arith.mulf %500, %506 : vector<4x32xf32>
    %508 = vector.broadcast %460 : i32 to vector<4x1xi32>
    %509 = arith.cmpi sgt, %6, %508 : vector<4x1xi32>
    %510 = vector.broadcast %460 : i32 to vector<4x1xi32>
    %511 = arith.cmpi sle, %7, %510 : vector<4x1xi32>
    %512 = vector.shape_cast %509 : vector<4x1xi1> to vector<4x1xi1>
    %513 = vector.broadcast %512 : vector<4x1xi1> to vector<4x32xi1>
    %514 = arith.select %513, %491, %450 : vector<4x32xi1>, vector<4x32xf32>
    %515 = vector.shape_cast %509 : vector<4x1xi1> to vector<4x1xi1>
    %516 = vector.broadcast %515 : vector<4x1xi1> to vector<4x32xi1>
    %517 = arith.select %516, %489, %453 : vector<4x32xi1>, vector<4x32xf32>
    %518 = vector.shape_cast %511 : vector<4x1xi1> to vector<4x1xi1>
    %519 = vector.broadcast %518 : vector<4x1xi1> to vector<4x32xi1>
    %520 = arith.select %519, %507, %456 : vector<4x32xi1>, vector<4x32xf32>
    %521 = vector.shape_cast %511 : vector<4x1xi1> to vector<4x1xi1>
    %522 = vector.broadcast %521 : vector<4x1xi1> to vector<4x32xi1>
    %523 = arith.select %522, %505, %459 : vector<4x32xi1>, vector<4x32xf32>
    %c8_i32_87 = arith.constant 8 : i32
    %c0_88 = arith.constant 0 : index
    %c0_89 = arith.constant 0 : index
    %524 = vector.load %arg7[%c0_88, %c0_89] : memref<4x32xf32, #tpu.memory_space<vmem>>, vector<4x32xf32>
    tpu.vector_store %arg7[%c0_88, %c0_89], %514 {strides = array<i32>} : memref<4x32xf32, #tpu.memory_space<vmem>>, vector<4x32xf32>,
    %c0_90 = arith.constant 0 : index
    %c0_91 = arith.constant 0 : index
    %525 = vector.load %arg8[%c0_90, %c0_91] : memref<4x32xf32, #tpu.memory_space<vmem>>, vector<4x32xf32>
    tpu.vector_store %arg8[%c0_90, %c0_91], %517 {strides = array<i32>} : memref<4x32xf32, #tpu.memory_space<vmem>>, vector<4x32xf32>,
    %c0_92 = arith.constant 0 : index
    %c0_93 = arith.constant 0 : index
    %526 = vector.load %arg9[%c0_92, %c0_93] : memref<4x32xf32, #tpu.memory_space<vmem>>, vector<4x32xf32>
    tpu.vector_store %arg9[%c0_92, %c0_93], %520 {strides = array<i32>} : memref<4x32xf32, #tpu.memory_space<vmem>>, vector<4x32xf32>,
    %c0_94 = arith.constant 0 : index
    %c0_95 = arith.constant 0 : index
    %527 = vector.load %arg10[%c0_94, %c0_95] : memref<4x32xf32, #tpu.memory_space<vmem>>, vector<4x32xf32>
    tpu.vector_store %arg10[%c0_94, %c0_95], %523 {strides = array<i32>} : memref<4x32xf32, #tpu.memory_space<vmem>>, vector<4x32xf32>,
    %c1_i32_96 = arith.constant 1 : i32
    %528 = arith.cmpi eq, %arg0, %c1_i32_96 : i32
    %529 = arith.extui %528 : i1 to i32
    %c0_i32_97 = arith.constant 0 : i32
    %530 = arith.cmpi ne, %529, %c0_i32_97 : i32
    scf.if %530 {
      %531 = tpu.concatenate %514, %520 in 1 : vector<4x32xf32>, vector<4x32xf32> -> vector<4x64xf32>
      %c0_98 = arith.constant 0 : index
      %c0_99 = arith.constant 0 : index
      %532 = vector.load %arg6[%c0_98, %c0_99] : memref<4x64xf32, #tpu.memory_space<vmem>>, vector<4x64xf32>
      tpu.vector_store %arg6[%c0_98, %c0_99], %531 {strides = array<i32>} : memref<4x64xf32, #tpu.memory_space<vmem>>, vector<4x64xf32>,
    } else {
    }
    return
  }
  func.func @transform_0(%arg0: i32) -> (i32, i32, i32) {
    %c0_i32 = arith.constant 0 : i32
    %c0_i32_0 = arith.constant 0 : i32
    %c0_i32_1 = arith.constant 0 : i32
    return %arg0, %c0_i32, %c0_i32_0 : i32, i32, i32
  }
  func.func @transform_1(%arg0: i32) -> (i32, i32, i32) {
    %c1_i32 = arith.constant 1 : i32
    %0 = arith.subi %c1_i32, %arg0 : i32
    %c0_i32 = arith.constant 0 : i32
    %c0_i32_0 = arith.constant 0 : i32
    %c0_i32_1 = arith.constant 0 : i32
    return %0, %c0_i32, %c0_i32_0 : i32, i32, i32
  }
  func.func @transform_2(%arg0: i32) -> (i32, i32) {
    %c0_i32 = arith.constant 0 : i32
    %c0_i32_0 = arith.constant 0 : i32
    %c0_i32_1 = arith.constant 0 : i32
    return %c0_i32, %c0_i32_0 : i32, i32
  }
  func.func @transform_3(%arg0: i32) -> (i32, i32) {
    %c0_i32 = arith.constant 0 : i32
    %c0_i32_0 = arith.constant 0 : i32
    %c0_i32_1 = arith.constant 0 : i32
    return %c0_i32, %c0_i32_0 : i32, i32
  }
  func.func @transform_4(%arg0: i32) -> (i32, i32) {
    %c0_i32 = arith.constant 0 : i32
    %c0_i32_0 = arith.constant 0 : i32
    %c0_i32_1 = arith.constant 0 : i32
    return %c0_i32, %c0_i32_0 : i32, i32
  }
  func.func @transform_5(%arg0: i32) -> (i32, i32) {
    %c0_i32 = arith.constant 0 : i32
    %c0_i32_0 = arith.constant 0 : i32
    %c0_i32_1 = arith.constant 0 : i32
    return %c0_i32, %c0_i32_0 : i32, i32
  }
}

</mosaic_0001>

<llo_original>
// kernel: lstm_encoder_forward.1
$region0: #{lstm_encoder_forward.1}
  #allocation0 [shape = 'u32[]', space=smem, size = 0x4, offset = 0x4, fixed_abs, tag = 'smem constant byte address 0x4 - core index']
  #allocation1 [shape = 'u32[144,128]{1,0:T(1,128)}', space=vmem, size = 0x12000, scoped, tag = 'internal scratch']
  #allocation2 [shape = 'f32[4,32]{1,0:T(4,128)}', space=vmem, size = 0x800, scoped, tag = 'scratch operand']
  #allocation3 [shape = 'f32[4,32]{1,0:T(4,128)}', space=vmem, size = 0x800, scoped, tag = 'scratch operand']
  #allocation4 [shape = 'f32[4,32]{1,0:T(4,128)}', space=vmem, size = 0x800, scoped, tag = 'scratch operand']
  #allocation5 [shape = 'f32[4,32]{1,0:T(4,128)}', space=vmem, size = 0x800, scoped, tag = 'scratch operand']
  %s0 = inlined_call_operand.vmem [shape: bf16[16,4,128], index: 0, kind: input, shape index: {}]
  %s1 = inlined_call_operand.vmem [shape: bf16[16,4,128], index: 1, kind: input, shape index: {}]
  %s2 = inlined_call_operand.vmem [shape: bf16[32,128], index: 2, kind: input, shape index: {}]
  %s3 = inlined_call_operand.vmem [shape: bf16[32,128], index: 3, kind: input, shape index: {}]
  %s4 = inlined_call_operand.vmem [shape: s32[4,2], index: 4, kind: input, shape index: {}]
  %s5 = inlined_call_operand.hbm [shape: f32[4,64], index: 5, kind: output, shape index: {}]
  %s6 = sld [smem:[#allocation0]]
  $region61: #{lstm_encoder_forward.1} parent=0
    _
  %s8 = ssub.s32 1, %s6
  %s9 = scalar_select 0, %s8, %s6
  $region1: #{lstm_encoder_forward.1} parent=0
    #allocation6 [shape = 'u8[2048]{0}', space=vmem, size = 0x800, scoped, tag = 'output window, operand 0, single buffered']
    #allocation7 [shape = 's32[2]{0}', space=sflag, size = 0x8, scoped, tag = 'scoped memory for lstm_encoder_forward.1']
    %10 = vsyncpa [#allocation7], 0
    loop: start=0, step=1, limit=4
    $region2: #{lstm_encoder_forward.1} parent=1 // loop_pre_header
      _
    $region3: #{lstm_encoder_forward.1} parent=1 // loop_header
      %s12 = sphi 0, %s16
      %p13 = scmp.ge.s32.totalorder %s12, 4
      %s22 = sphi 0, %s24
      %s25 = sphi 0, %s22
      %s26 = sphi 0, %s25
      %s42 = sphi 0, %s26
      %s50 = sphi 0, %s52
      %s53 = sphi 0, %s50
      %s54 = sphi 0, %s53
      %s70 = sphi 0, %s54
      %s74 = sphi 0, %s74
      %s76 = sphi 0, %s74
      %s77 = sphi 0, %s76
      %s91 = sphi 0, %s77
      %s95 = sphi 0, %s95
      %s97 = sphi 0, %s95
      %s98 = sphi 0, %s97
      %s112 = sphi 0, %s98
      %s116 = sphi 0, %s116
      %s118 = sphi 0, %s116
      %s119 = sphi 0, %s118
      %s133 = sphi 0, %s119
      %s137 = sphi 0, %s137
      %s139 = sphi 0, %s137
      %s140 = sphi 0, %s139
      %s154 = sphi 0, %s140
    $region4: #{lstm_encoder_forward.1} parent=1 // loop_header_branch
      %15 = sbr.rel (%p13) target = $region8
    $region5: #{lstm_encoder_forward.1} parent=1 // loop_body
      %s17 = ssub.s32 %s12, 1
      %s18 = ssub.s32 %s12, 2
      %s19 = sadd.s32 %s12, 1
      %s20 = ssub.s32 %s12, %s19
      %p21 = scmp.eq.s32.totalorder %s20, 0
      %s23 = sadd.s32 %s22, 1
      %s24 = scalar_select %p21, %s22, %s23
      %p27 = pneg %p21
      %p28 = scmp.eq.s32.totalorder %s12, 1
      %p29 = por %p27, %p28
      %p30 = scmp.ne.s32.totalorder %s22, %s25
      %p31 = scmp.eq.s32.totalorder %s12, 0
      %p32 = por %p30, %p31
      %p33 = scmp.ne.s32.totalorder %s22, %s25
      %p34 = scmp.eq.s32.totalorder %s17, 1
      %p35 = por %p33, %p34
      %p36 = scmp.ne.s32.totalorder %s25, %s26
      %p37 = scmp.eq.s32.totalorder %s17, 0
      %p38 = por %p36, %p37
      %p39 = scmp.ne.s32.totalorder %s25, %s26
      %p40 = scmp.eq.s32.totalorder %s18, 1
      %p41 = por %p39, %p40
      %p43 = scmp.ne.s32.totalorder %s26, %s42
      %p44 = scmp.eq.s32.totalorder %s18, 0
      %p45 = por %p43, %p44
      %s46 = ssub.s32 1, %s12
      %s47 = ssub.s32 1, %s19
      %s48 = ssub.s32 %s46, %s47
      %p49 = scmp.eq.s32.totalorder %s48, 0
      %s51 = sadd.s32 %s50, 1
      %s52 = scalar_select %p49, %s50, %s51
      %p55 = pneg %p49
      %p56 = scmp.eq.s32.totalorder %s12, 1
      %p57 = por %p55, %p56
      %p58 = scmp.ne.s32.totalorder %s50, %s53
      %p59 = scmp.eq.s32.totalorder %s12, 0
      %p60 = por %p58, %p59
      %p61 = scmp.ne.s32.totalorder %s50, %s53
      %p62 = scmp.eq.s32.totalorder %s17, 1
      %p63 = por %p61, %p62
      %p64 = scmp.ne.s32.totalorder %s53, %s54
      %p65 = scmp.eq.s32.totalorder %s17, 0
      %p66 = por %p64, %p65
      %p67 = scmp.ne.s32.totalorder %s53, %s54
      %p68 = scmp.eq.s32.totalorder %s18, 1
      %p69 = por %p67, %p68
      %p71 = scmp.ne.s32.totalorder %s54, %s70
      %p72 = scmp.eq.s32.totalorder %s18, 0
      %p73 = por %p71, %p72
      %s75 = sadd.s32 %s74, 1
      %p78 = scmp.eq.s32.totalorder %s12, 1
      %p79 = scmp.ne.s32.totalorder %s74, %s76
      %p80 = scmp.eq.s32.totalorder %s12, 0
      %p81 = por %p79, %p80
      %p82 = scmp.ne.s32.totalorder %s74, %s76
      %p83 = scmp.eq.s32.totalorder %s17, 1
      %p84 = por %p82, %p83
      %p85 = scmp.ne.s32.totalorder %s76, %s77
      %p86 = scmp.eq.s32.totalorder %s17, 0
      %p87 = por %p85, %p86
      %p88 = scmp.ne.s32.totalorder %s76, %s77
      %p89 = scmp.eq.s32.totalorder %s18, 1
      %p90 = por %p88, %p89
      %p92 = scmp.ne.s32.totalorder %s77, %s91
      %p93 = scmp.eq.s32.totalorder %s18, 0
      %p94 = por %p92, %p93
      %s96 = sadd.s32 %s95, 1
      %p99 = scmp.eq.s32.totalorder %s12, 1
      %p100 = scmp.ne.s32.totalorder %s95, %s97
      %p101 = scmp.eq.s32.totalorder %s12, 0
      %p102 = por %p100, %p101
      %p103 = scmp.ne.s32.totalorder %s95, %s97
      %p104 = scmp.eq.s32.totalorder %s17, 1
      %p105 = por %p103, %p104
      %p106 = scmp.ne.s32.totalorder %s97, %s98
      %p107 = scmp.eq.s32.totalorder %s17, 0
      %p108 = por %p106, %p107
      %p109 = scmp.ne.s32.totalorder %s97, %s98
      %p110 = scmp.eq.s32.totalorder %s18, 1
      %p111 = por %p109, %p110
      %p113 = scmp.ne.s32.totalorder %s98, %s112
      %p114 = scmp.eq.s32.totalorder %s18, 0
      %p115 = por %p113, %p114
      %s117 = sadd.s32 %s116, 1
      %p120 = scmp.eq.s32.totalorder %s12, 1
      %p121 = scmp.ne.s32.totalorder %s116, %s118
      %p122 = scmp.eq.s32.totalorder %s12, 0
      %p123 = por %p121, %p122
      %p124 = scmp.ne.s32.totalorder %s116, %s118
      %p125 = scmp.eq.s32.totalorder %s17, 1
      %p126 = por %p124, %p125
      %p127 = scmp.ne.s32.totalorder %s118, %s119
      %p128 = scmp.eq.s32.totalorder %s17, 0
      %p129 = por %p127, %p128
      %p130 = scmp.ne.s32.totalorder %s118, %s119
      %p131 = scmp.eq.s32.totalorder %s18, 1
      %p132 = por %p130, %p131
      %p134 = scmp.ne.s32.totalorder %s119, %s133
      %p135 = scmp.eq.s32.totalorder %s18, 0
      %p136 = por %p134, %p135
      %s138 = sadd.s32 %s137, 1
      %p141 = scmp.eq.s32.totalorder %s12, 1
      %p142 = scmp.ne.s32.totalorder %s137, %s139
      %p143 = scmp.eq.s32.totalorder %s12, 0
      %p144 = por %p142, %p143
      %p145 = scmp.ne.s32.totalorder %s137, %s139
      %p146 = scmp.eq.s32.totalorder %s17, 1
      %p147 = por %p145, %p146
      %p148 = scmp.ne.s32.totalorder %s139, %s140
      %p149 = scmp.eq.s32.totalorder %s17, 0
      %p150 = por %p148, %p149
      %p151 = scmp.ne.s32.totalorder %s139, %s140
      %p152 = scmp.eq.s32.totalorder %s18, 1
      %p153 = por %p151, %p152
      %p155 = scmp.ne.s32.totalorder %s140, %s154
      %p156 = scmp.eq.s32.totalorder %s18, 0
      %p157 = por %p155, %p156
      %p158 = scmp.le.s32.totalorder 1, %s12
      %p159 = scmp.lt.s32.totalorder %s12, 3
      %p160 = pnand %p158, %p159
      %p161 = pneg %p160
      // Predicated region
      $region9: #{lstm_encoder_forward.1} parent=5 // pred_check
        _
      $region10: #{lstm_encoder_forward.1} parent=5 // pred_check_branch
        %163 = sbr.rel (%p160) target = $region12
      $region11: #{lstm_encoder_forward.1} parent=5 // pred_region
        %s164 = ssub.s32 %s12, 1
        // Predicated region
        $region13: #{lstm_encoder_forward.1} parent=11 // pred_check
          %p165 = pneg %p87
        $region14: #{lstm_encoder_forward.1} parent=11 // pred_check_branch
          %167 = sbr.rel (%p165) target = $region16
        $region15: #{lstm_encoder_forward.1} parent=11 // pred_region
          _
        $region16: #{lstm_encoder_forward.1} parent=11 // pred_fallthru
          _
        // Predicated region
        $region17: #{lstm_encoder_forward.1} parent=11 // pred_check
          %p168 = pneg %p108
        $region18: #{lstm_encoder_forward.1} parent=11 // pred_check_branch
          %170 = sbr.rel (%p168) target = $region20
        $region19: #{lstm_encoder_forward.1} parent=11 // pred_region
          _
        $region20: #{lstm_encoder_forward.1} parent=11 // pred_fallthru
          _
        // Predicated region
        $region21: #{lstm_encoder_forward.1} parent=11 // pred_check
          %p171 = pneg %p129
        $region22: #{lstm_encoder_forward.1} parent=11 // pred_check_branch
          %173 = sbr.rel (%p171) target = $region24
        $region23: #{lstm_encoder_forward.1} parent=11 // pred_region
          _
        $region24: #{lstm_encoder_forward.1} parent=11 // pred_fallthru
          _
      $region12: #{lstm_encoder_forward.1} parent=5 // pred_fallthru
        _
      %p174 = scmp.lt.s32.totalorder %s12, 2
      // Predicated region
      $region25: #{lstm_encoder_forward.1} parent=5 // pred_check
        %p175 = pneg %p174
      $region26: #{lstm_encoder_forward.1} parent=5 // pred_check_branch
        %177 = sbr.rel (%p175) target = $region28
      $region27: #{lstm_encoder_forward.1} parent=5 // pred_region
        // Predicated region
        $region29: #{lstm_encoder_forward.1} parent=27 // pred_check
          %p178 = pneg %p32
        $region30: #{lstm_encoder_forward.1} parent=27 // pred_check_branch
          %180 = sbr.rel (%p178) target = $region32
        $region31: #{lstm_encoder_forward.1} parent=27 // pred_region
          %s181 = smul.u32 8, %s12
          %p182 = scmp.lt.s32.totalorder %s181, 15
          %s183 = scalar_select %p182, %s181, 15
          %s184 = smul.addr %s183, 2
          %s185 = scalar_lea.vmem %s0, %s184
          %s186 = smul.u32 8, %s12
        $region32: #{lstm_encoder_forward.1} parent=27 // pred_fallthru
          _
        // Predicated region
        $region33: #{lstm_encoder_forward.1} parent=27 // pred_check
          %p187 = pneg %p60
        $region34: #{lstm_encoder_forward.1} parent=27 // pred_check_branch
          %189 = sbr.rel (%p187) target = $region36
        $region35: #{lstm_encoder_forward.1} parent=27 // pred_region
          %s190 = ssub.s32 1, %s12
          %s191 = smul.u32 8, %s190
          %p192 = scmp.lt.s32.totalorder %s191, 15
          %s193 = scalar_select %p192, %s191, 15
          %s194 = smul.addr %s193, 2
          %s195 = scalar_lea.vmem %s1, %s194
          %s196 = ssub.s32 1, %s12
          %s197 = smul.u32 8, %s196
        $region36: #{lstm_encoder_forward.1} parent=27 // pred_fallthru
          _
      $region28: #{lstm_encoder_forward.1} parent=5 // pred_fallthru
        _
      %p198 = scmp.le.s32.totalorder 1, %s12
      %p199 = scmp.lt.s32.totalorder %s12, 3
      %p200 = pnand %p198, %p199
      %p201 = pneg %p200
      // Predicated region
      $region37: #{lstm_encoder_forward.1} parent=5 // pred_check
        _
      $region38: #{lstm_encoder_forward.1} parent=5 // pred_check_branch
        %203 = sbr.rel (%p200) target = $region40
      $region39: #{lstm_encoder_forward.1} parent=5 // pred_region
        %s204 = ssub.s32 %s12, 1
        %s205 = smul.u32 8, %s17
        %p206 = scmp.lt.s32.totalorder %s205, 15
        %s207 = scalar_select %p206, %s205, 15
        %s208 = smul.addr %s207, 2
        %s209 = scalar_lea.vmem %s0, %s208
        %p210 = pneg %p38
        %p211 = pneg %p35
        %s212 = ssub.s32 1, %s17
        %s213 = smul.u32 8, %s212
        %p214 = scmp.lt.s32.totalorder %s213, 15
        %s215 = scalar_select %p214, %s213, 15
        %s216 = smul.addr %s215, 2
        %s217 = scalar_lea.vmem %s1, %s216
        %p218 = pneg %p66
        %p219 = pneg %p63
        %p220 = pneg %p87
        %p221 = pneg %p84
        %p222 = pneg %p108
        %p223 = pneg %p105
        %p224 = pneg %p129
        %p225 = pneg %p126
        %p226 = pneg %p150
        %p227 = pneg %p147
        %s228 = smul.u32 8, %s17
        %p229 = scmp.lt.s32.totalorder %s228, 15
        %s230 = scalar_select %p229, %s228, 15
        %s231 = smul.addr %s230, 2
        %s232 = scalar_lea.vmem %s0, %s231
        %s233 = smul.u32 8, %s17
        %s234 = ssub.s32 1, %s17
        %s235 = smul.u32 8, %s234
        %p236 = scmp.lt.s32.totalorder %s235, 15
        %s237 = scalar_select %p236, %s235, 15
        %s238 = smul.addr %s237, 2
        %s239 = scalar_lea.vmem %s1, %s238
        %s240 = ssub.s32 1, %s17
        %s241 = smul.u32 8, %s240
        %s243 = smul.u32 %s17, 8
        %p244 = scmp.eq.s32.totalorder %s17, 0
        // Predicated region
        $region41: #{lstm_encoder_forward.1} parent=39 // pred_check
          %p245 = pneg %p244
        $region42: #{lstm_encoder_forward.1} parent=39 // pred_check_branch
          %247 = sbr.rel (%p245) target = $region44
        $region43: #{lstm_encoder_forward.1} parent=39 // pred_region
          %vm248 = vcmask 257024
          %249 = vst.msk [vmem:[#allocation2] sm:$0xf] %vm248, 0.0
          %250 = vst.msk [vmem:[#allocation3] sm:$0xf] %vm248, 0.0
          %251 = vst.msk [vmem:[#allocation4] sm:$0xf] %vm248, 0.0
          %252 = vst.msk [vmem:[#allocation5] sm:$0xf] %vm248, 0.0
        $region44: #{lstm_encoder_forward.1} parent=39 // pred_fallthru
          _
        %v253 = vld [vmem:[%s2] sm:$0xf]
        %v254 = vld [vmem:[%s2 + $0x4] sm:$0xf]
        %v255 = vld [vmem:[%s2 + $0x8] sm:$0xf]
        %v256 = vld [vmem:[%s2 + $0xc] sm:$0xf]
        %v257 = vld [vmem:[%s3] sm:$0xf]
        %v258 = vld [vmem:[%s3 + $0x4] sm:$0xf]
        %v259 = vld [vmem:[%s3 + $0x8] sm:$0xf]
        %v260 = vld [vmem:[%s3 + $0xc] sm:$0xf]
        %v261 = vld [vmem:[%s4] sm:$0xf]
        %v262 = vld [vmem:[#allocation2] sm:$0xf]
        %v263 = vld [vmem:[#allocation3] sm:$0xf]
        %v264 = vld [vmem:[#allocation4] sm:$0xf]
        %v265 = vld [vmem:[#allocation5] sm:$0xf]
        %v266 = vpack.c.bf16 %v262, %v262
        %v267 = vld [vmem:[%s232] sm:$0x3]
        %v268 = vunpack.c.l.bf16 %v267
        %v273 = vunpack.c.l.b16 %v253
        %v274 = vunpack.c.l.b16 %v254
        %v275 = vunpack.c.l.b16 %v255
        %v276 = vunpack.c.l.b16 %v256
        %v277 = vpack.c.b16 %v274, %v273
        %v278 = vpack.c.b16 %v276, %v275
        %vm281 = vcmask 261120
        %v283 = vsel %vm281, %v266, 0
        %285 = vmatprep.subr.bf16.mxu0 0
        %286 = vmatpush1.bf16.msra.mxu0 %v277
        %287 = vmatprep.subr.bf16.mxu0 0
        %288 = vmatpush1.bf16.msra.mxu0 %v278
        %289 = vmatprep.subr.bf16.mxu0 0
        %290 = vmatpush1.bf16.msra.mxu0 0
        %291 = vmatprep.subr.bf16.mxu0 0
        %292 = vmatpush1.bf16.msra.mxu0 0
        %293 = vmatprep.subr.bf16.mxu0 0
        %294 = vmatpush1.bf16.msra.mxu0 0
        %295 = vmatprep.subr.bf16.mxu0 0
        %296 = vmatpush1.bf16.msra.mxu0 0
        %297 = vmatprep.subr.bf16.mxu0 0
        %298 = vmatpush1.bf16.msra.mxu0 0
        %299 = vmatprep.subr.bf16.mxu0 0
        %300 = vmatpush1.bf16.msra.mxu0 0
        %301 = vmatprep.subr.bf16.mxu0 0
        %302 = vmatpush1.bf16.msra.mxu0 0
        %303 = vmatprep.subr.bf16.mxu0 0
        %304 = vmatpush1.bf16.msra.mxu0 0
        %305 = vmatprep.subr.bf16.mxu0 0
        %306 = vmatpush1.bf16.msra.mxu0 0
        %307 = vmatprep.subr.bf16.mxu0 0
        %308 = vmatpush1.bf16.msra.mxu0 0
        %309 = vmatprep.subr.bf16.mxu0 0
        %310 = vmatpush1.bf16.msra.mxu0 0
        %311 = vmatprep.subr.bf16.mxu0 0
        %312 = vmatpush1.bf16.msra.mxu0 0
        %313 = vmatprep.subr.bf16.mxu0 0
        %314 = vmatpush1.bf16.msra.mxu0 0
        %315 = vmatprep.subr.bf16.mxu0 0
        %316 = vmatpush1.bf16.msra.mxu0 0
        %317 = vmatprep.mubr.bf16.mxu0 0
        %318 = vmatmul.mubr.bf16.gmra.mrb[0].mxu0 %v283
        %v319 = vpop.f32.mrb[0].mxu0
        %v320 = vadd.f32 %v268, %v319
        %v321 = vpop.f32.mrb[0].mxu0
        %v322 = vpop.f32.mrb[0].mxu0
        %v323 = vpop.f32.mrb[0].mxu0
        %324 = vdwg.mxu0
        %v325 = vpack.c.bf16 %v264, %v264
        %s326 = scalar_lea.vmem %s239, 14
        %v327 = vld [vmem:[%s326] sm:$0x3]
        %v328 = vunpack.c.l.bf16 %v327
        %v333 = vunpack.c.l.b16 %v257
        %v334 = vunpack.c.l.b16 %v258
        %v335 = vunpack.c.l.b16 %v259
        %v336 = vunpack.c.l.b16 %v260
        %v337 = vpack.c.b16 %v334, %v333
        %v338 = vpack.c.b16 %v336, %v335
        %v342 = vsel %vm281, %v325, 0
        %344 = vmatprep.subr.bf16.mxu0 0
        %345 = vmatpush1.bf16.msra.mxu0 %v337
        %346 = vmatprep.subr.bf16.mxu0 0
        %347 = vmatpush1.bf16.msra.mxu0 %v338
        %348 = vmatprep.subr.bf16.mxu0 0
        %349 = vmatpush1.bf16.msra.mxu0 0
        %350 = vmatprep.subr.bf16.mxu0 0
        %351 = vmatpush1.bf16.msra.mxu0 0
        %352 = vmatprep.subr.bf16.mxu0 0
        %353 = vmatpush1.bf16.msra.mxu0 0
        %354 = vmatprep.subr.bf16.mxu0 0
        %355 = vmatpush1.bf16.msra.mxu0 0
        %356 = vmatprep.subr.bf16.mxu0 0
        %357 = vmatpush1.bf16.msra.mxu0 0
        %358 = vmatprep.subr.bf16.mxu0 0
        %359 = vmatpush1.bf16.msra.mxu0 0
        %360 = vmatprep.subr.bf16.mxu0 0
        %361 = vmatpush1.bf16.msra.mxu0 0
        %362 = vmatprep.subr.bf16.mxu0 0
        %363 = vmatpush1.bf16.msra.mxu0 0
        %364 = vmatprep.subr.bf16.mxu0 0
        %365 = vmatpush1.bf16.msra.mxu0 0
        %366 = vmatprep.subr.bf16.mxu0 0
        %367 = vmatpush1.bf16.msra.mxu0 0
        %368 = vmatprep.subr.bf16.mxu0 0
        %369 = vmatpush1.bf16.msra.mxu0 0
        %370 = vmatprep.subr.bf16.mxu0 0
        %371 = vmatpush1.bf16.msra.mxu0 0
        %372 = vmatprep.subr.bf16.mxu0 0
        %373 = vmatpush1.bf16.msra.mxu0 0
        %374 = vmatprep.subr.bf16.mxu0 0
        %375 = vmatpush1.bf16.msra.mxu0 0
        %376 = vmatprep.mubr.bf16.mxu0 0
        %377 = vmatmul.mubr.bf16.gmra.mrb[0].mxu0 %v342
        %v378 = vpop.f32.mrb[0].mxu0
        %v379 = vadd.f32 %v328, %v378
        %v380 = vpop.f32.mrb[0].mxu0
        %v381 = vpop.f32.mrb[0].mxu0
        %v382 = vpop.f32.mrb[0].mxu0
        %383 = vdwg.mxu0
        %v384 = vxor.u32 %v320, 2147483648
        %v385 = vmul.f32 %v384, 1.442695
        %v386 = vpow.pop %v385
        %v387 = vadd.f32 %v386, 1.0
        %v388 = vrcp.pop %v387
        %v389 = vmul.f32 1.0, %v388
        %v390 = vtanh.pop %v320
        %392 = vrot.lane.b32.xlu0 %v263, 32
        %v393 = vpop.permute.xlu0 %392
        %v395 = vmul.f32 %v389, %v393
        %397 = vrot.lane.b32.xlu0 %v390, 32
        %v398 = vpop.permute.xlu0 %397
        %v400 = vmul.f32 %v389, %v398
        %402 = vrot.lane.b32.xlu0 %v400, 32
        %v403 = vpop.permute.xlu0 %402
        %v405 = vadd.f32 %v395, %v403
        %v406 = vtanh.pop %v405
        %408 = vrot.lane.b32.xlu0 %v406, 32
        %v409 = vpop.permute.xlu0 %408
        %v411 = vmul.f32 %v389, %v409
        %v412 = vxor.u32 %v379, 2147483648
        %v413 = vmul.f32 %v412, 1.442695
        %v414 = vpow.pop %v413
        %v415 = vadd.f32 %v414, 1.0
        %v416 = vrcp.pop %v415
        %v417 = vmul.f32 1.0, %v416
        %v418 = vtanh.pop %v379
        %420 = vrot.lane.b32.xlu0 %v265, 32
        %v421 = vpop.permute.xlu0 %420
        %v423 = vmul.f32 %v417, %v421
        %425 = vrot.lane.b32.xlu0 %v418, 32
        %v426 = vpop.permute.xlu0 %425
        %v428 = vmul.f32 %v417, %v426
        %430 = vrot.lane.b32.xlu0 %v428, 32
        %v431 = vpop.permute.xlu0 %430
        %v433 = vadd.f32 %v423, %v431
        %v434 = vtanh.pop %v433
        %436 = vrot.lane.b32.xlu0 %v434, 32
        %v437 = vpop.permute.xlu0 %436
        %v439 = vmul.f32 %v417, %v437
        %v440 = vstv %s243
        %vm441 = vcmp.gt.s32.totalorder %v261, %v440
        %vm442 = vcmp.le.s32.totalorder %v261, %v440
        %v443 = vsel %vm441, 1, 0
        %444 = vset.pattern.permute.xlu0 0
        %445 = vperm.xlu0 %444, %v443
        %v446 = vpop.permute.xlu0 %445
        %vm447 = vcmp.eq.s32.totalorder %v446, 1
        %449 = vrot.lane.b32.xlu0 %v262, 64
        %v450 = vpop.permute.xlu0 %449
        %v452 = vsel %vm447, %v411, %v450
        %v453 = vsel %vm447, %v405, %v393
        %v454 = vsel %vm442, 1, 0
        %455 = vset.pattern.permute.xlu0 1
        %456 = vperm.xlu0 %455, %v454
        %v457 = vpop.permute.xlu0 %456
        %vm458 = vcmp.eq.s32.totalorder %v457, 1
        %460 = vrot.lane.b32.xlu0 %v264, 64
        %v461 = vpop.permute.xlu0 %460
        %v463 = vsel %vm458, %v439, %v461
        %v464 = vsel %vm458, %v433, %v421
        %s465 = sadd.s32 %s243, 1
        %v466 = vpack.c.bf16 %v452, %v452
        %s467 = scalar_lea.vmem %s232, 2
        %v468 = vld [vmem:[%s467] sm:$0x3]
        %v469 = vunpack.c.l.bf16 %v468
        %471 = vrot.lane.b32.xlu0 %v466, 64
        %v472 = vpop.permute.xlu0 %471
        %v474 = vsel %vm281, %v472, 0
        %476 = vmatprep.subr.bf16.mxu0 0
        %477 = vmatpush1.bf16.msra.mxu0 %v277
        %478 = vmatprep.subr.bf16.mxu0 0
        %479 = vmatpush1.bf16.msra.mxu0 %v278
        %480 = vmatprep.subr.bf16.mxu0 0
        %481 = vmatpush1.bf16.msra.mxu0 0
        %482 = vmatprep.subr.bf16.mxu0 0
        %483 = vmatpush1.bf16.msra.mxu0 0
        %484 = vmatprep.subr.bf16.mxu0 0
        %485 = vmatpush1.bf16.msra.mxu0 0
        %486 = vmatprep.subr.bf16.mxu0 0
        %487 = vmatpush1.bf16.msra.mxu0 0
        %488 = vmatprep.subr.bf16.mxu0 0
        %489 = vmatpush1.bf16.msra.mxu0 0
        %490 = vmatprep.subr.bf16.mxu0 0
        %491 = vmatpush1.bf16.msra.mxu0 0
        %492 = vmatprep.subr.bf16.mxu0 0
        %493 = vmatpush1.bf16.msra.mxu0 0
        %494 = vmatprep.subr.bf16.mxu0 0
        %495 = vmatpush1.bf16.msra.mxu0 0
        %496 = vmatprep.subr.bf16.mxu0 0
        %497 = vmatpush1.bf16.msra.mxu0 0
        %498 = vmatprep.subr.bf16.mxu0 0
        %499 = vmatpush1.bf16.msra.mxu0 0
        %500 = vmatprep.subr.bf16.mxu0 0
        %501 = vmatpush1.bf16.msra.mxu0 0
        %502 = vmatprep.subr.bf16.mxu0 0
        %503 = vmatpush1.bf16.msra.mxu0 0
        %504 = vmatprep.subr.bf16.mxu0 0
        %505 = vmatpush1.bf16.msra.mxu0 0
        %506 = vmatprep.subr.bf16.mxu0 0
        %507 = vmatpush1.bf16.msra.mxu0 0
        %508 = vmatprep.mubr.bf16.mxu0 0
        %509 = vmatmul.mubr.bf16.gmra.mrb[0].mxu0 %v474
        %v510 = vpop.f32.mrb[0].mxu0
        %v511 = vadd.f32 %v469, %v510
        %v512 = vpop.f32.mrb[0].mxu0
        %v513 = vpop.f32.mrb[0].mxu0
        %v514 = vpop.f32.mrb[0].mxu0
        %515 = vdwg.mxu0
        %v516 = vpack.c.bf16 %v463, %v463
        %s517 = scalar_lea.vmem %s239, 12
        %v518 = vld [vmem:[%s517] sm:$0x3]
        %v519 = vunpack.c.l.bf16 %v518
        %521 = vrot.lane.b32.xlu0 %v516, 64
        %v522 = vpop.permute.xlu0 %521
        %v524 = vsel %vm281, %v522, 0
        %526 = vmatprep.subr.bf16.mxu0 0
        %527 = vmatpush1.bf16.msra.mxu0 %v337
        %528 = vmatprep.subr.bf16.mxu0 0
        %529 = vmatpush1.bf16.msra.mxu0 %v338
        %530 = vmatprep.subr.bf16.mxu0 0
        %531 = vmatpush1.bf16.msra.mxu0 0
        %532 = vmatprep.subr.bf16.mxu0 0
        %533 = vmatpush1.bf16.msra.mxu0 0
        %534 = vmatprep.subr.bf16.mxu0 0
        %535 = vmatpush1.bf16.msra.mxu0 0
        %536 = vmatprep.subr.bf16.mxu0 0
        %537 = vmatpush1.bf16.msra.mxu0 0
        %538 = vmatprep.subr.bf16.mxu0 0
        %539 = vmatpush1.bf16.msra.mxu0 0
        %540 = vmatprep.subr.bf16.mxu0 0
        %541 = vmatpush1.bf16.msra.mxu0 0
        %542 = vmatprep.subr.bf16.mxu0 0
        %543 = vmatpush1.bf16.msra.mxu0 0
        %544 = vmatprep.subr.bf16.mxu0 0
        %545 = vmatpush1.bf16.msra.mxu0 0
        %546 = vmatprep.subr.bf16.mxu0 0
        %547 = vmatpush1.bf16.msra.mxu0 0
        %548 = vmatprep.subr.bf16.mxu0 0
        %549 = vmatpush1.bf16.msra.mxu0 0
        %550 = vmatprep.subr.bf16.mxu0 0
        %551 = vmatpush1.bf16.msra.mxu0 0
        %552 = vmatprep.subr.bf16.mxu0 0
        %553 = vmatpush1.bf16.msra.mxu0 0
        %554 = vmatprep.subr.bf16.mxu0 0
        %555 = vmatpush1.bf16.msra.mxu0 0
        %556 = vmatprep.subr.bf16.mxu0 0
        %557 = vmatpush1.bf16.msra.mxu0 0
        %558 = vmatprep.mubr.bf16.mxu0 0
        %559 = vmatmul.mubr.bf16.gmra.mrb[0].mxu0 %v524
        %v560 = vpop.f32.mrb[0].mxu0
        %v561 = vadd.f32 %v519, %v560
        %v562 = vpop.f32.mrb[0].mxu0
        %v563 = vpop.f32.mrb[0].mxu0
        %v564 = vpop.f32.mrb[0].mxu0
        %565 = vdwg.mxu0
        %v566 = vxor.u32 %v511, 2147483648
        %v567 = vmul.f32 %v566, 1.442695
        %v568 = vpow.pop %v567
        %v569 = vadd.f32 %v568, 1.0
        %v570 = vrcp.pop %v569
        %v571 = vmul.f32 1.0, %v570
        %v572 = vtanh.pop %v511
        %v573 = vmul.f32 %v571, %v453
        %575 = vrot.lane.b32.xlu0 %v572, 32
        %v576 = vpop.permute.xlu0 %575
        %v578 = vmul.f32 %v571, %v576
        %580 = vrot.lane.b32.xlu0 %v578, 32
        %v581 = vpop.permute.xlu0 %580
        %v583 = vadd.f32 %v573, %v581
        %v584 = vtanh.pop %v583
        %586 = vrot.lane.b32.xlu0 %v584, 32
        %v587 = vpop.permute.xlu0 %586
        %v589 = vmul.f32 %v571, %v587
        %v590 = vxor.u32 %v561, 2147483648
        %v591 = vmul.f32 %v590, 1.442695
        %v592 = vpow.pop %v591
        %v593 = vadd.f32 %v592, 1.0
        %v594 = vrcp.pop %v593
        %v595 = vmul.f32 1.0, %v594
        %v596 = vtanh.pop %v561
        %v597 = vmul.f32 %v595, %v464
        %599 = vrot.lane.b32.xlu0 %v596, 32
        %v600 = vpop.permute.xlu0 %599
        %v602 = vmul.f32 %v595, %v600
        %604 = vrot.lane.b32.xlu0 %v602, 32
        %v605 = vpop.permute.xlu0 %604
        %v607 = vadd.f32 %v597, %v605
        %v608 = vtanh.pop %v607
        %610 = vrot.lane.b32.xlu0 %v608, 32
        %v611 = vpop.permute.xlu0 %610
        %v613 = vmul.f32 %v595, %v611
        %v614 = vstv %s465
        %vm615 = vcmp.gt.s32.totalorder %v261, %v614
        %vm616 = vcmp.le.s32.totalorder %v261, %v614
        %v617 = vsel %vm615, 1, 0
        %618 = vset.pattern.permute.xlu0 0
        %619 = vperm.xlu0 %618, %v617
        %v620 = vpop.permute.xlu0 %619
        %vm621 = vcmp.eq.s32.totalorder %v620, 1
        %v622 = vsel %vm621, %v589, %v452
        %v623 = vsel %vm621, %v583, %v453
        %v624 = vsel %vm616, 1, 0
        %625 = vset.pattern.permute.xlu0 1
        %626 = vperm.xlu0 %625, %v624
        %v627 = vpop.permute.xlu0 %626
        %vm628 = vcmp.eq.s32.totalorder %v627, 1
        %v629 = vsel %vm628, %v613, %v463
        %v630 = vsel %vm628, %v607, %v464
        %s631 = sadd.s32 %s243, 2
        %v632 = vpack.c.bf16 %v622, %v622
        %s633 = scalar_lea.vmem %s232, 4
        %v634 = vld [vmem:[%s633] sm:$0x3]
        %v635 = vunpack.c.l.bf16 %v634
        %637 = vrot.lane.b32.xlu0 %v632, 64
        %v638 = vpop.permute.xlu0 %637
        %v640 = vsel %vm281, %v638, 0
        %642 = vmatprep.subr.bf16.mxu0 0
        %643 = vmatpush1.bf16.msra.mxu0 %v277
        %644 = vmatprep.subr.bf16.mxu0 0
        %645 = vmatpush1.bf16.msra.mxu0 %v278
        %646 = vmatprep.subr.bf16.mxu0 0
        %647 = vmatpush1.bf16.msra.mxu0 0
        %648 = vmatprep.subr.bf16.mxu0 0
        %649 = vmatpush1.bf16.msra.mxu0 0
        %650 = vmatprep.subr.bf16.mxu0 0
        %651 = vmatpush1.bf16.msra.mxu0 0
        %652 = vmatprep.subr.bf16.mxu0 0
        %653 = vmatpush1.bf16.msra.mxu0 0
        %654 = vmatprep.subr.bf16.mxu0 0
        %655 = vmatpush1.bf16.msra.mxu0 0
        %656 = vmatprep.subr.bf16.mxu0 0
        %657 = vmatpush1.bf16.msra.mxu0 0
        %658 = vmatprep.subr.bf16.mxu0 0
        %659 = vmatpush1.bf16.msra.mxu0 0
        %660 = vmatprep.subr.bf16.mxu0 0
        %661 = vmatpush1.bf16.msra.mxu0 0
        %662 = vmatprep.subr.bf16.mxu0 0
        %663 = vmatpush1.bf16.msra.mxu0 0
        %664 = vmatprep.subr.bf16.mxu0 0
        %665 = vmatpush1.bf16.msra.mxu0 0
        %666 = vmatprep.subr.bf16.mxu0 0
        %667 = vmatpush1.bf16.msra.mxu0 0
        %668 = vmatprep.subr.bf16.mxu0 0
        %669 = vmatpush1.bf16.msra.mxu0 0
        %670 = vmatprep.subr.bf16.mxu0 0
        %671 = vmatpush1.bf16.msra.mxu0 0
        %672 = vmatprep.subr.bf16.mxu0 0
        %673 = vmatpush1.bf16.msra.mxu0 0
        %674 = vmatprep.mubr.bf16.mxu0 0
        %675 = vmatmul.mubr.bf16.gmra.mrb[0].mxu0 %v640
        %v676 = vpop.f32.mrb[0].mxu0
        %v677 = vadd.f32 %v635, %v676
        %v678 = vpop.f32.mrb[0].mxu0
        %v679 = vpop.f32.mrb[0].mxu0
        %v680 = vpop.f32.mrb[0].mxu0
        %681 = vdwg.mxu0
        %v682 = vpack.c.bf16 %v629, %v629
        %s683 = scalar_lea.vmem %s239, 10
        %v684 = vld [vmem:[%s683] sm:$0x3]
        %v685 = vunpack.c.l.bf16 %v684
        %687 = vrot.lane.b32.xlu0 %v682, 64
        %v688 = vpop.permute.xlu0 %687
        %v690 = vsel %vm281, %v688, 0
        %692 = vmatprep.subr.bf16.mxu0 0
        %693 = vmatpush1.bf16.msra.mxu0 %v337
        %694 = vmatprep.subr.bf16.mxu0 0
        %695 = vmatpush1.bf16.msra.mxu0 %v338
        %696 = vmatprep.subr.bf16.mxu0 0
        %697 = vmatpush1.bf16.msra.mxu0 0
        %698 = vmatprep.subr.bf16.mxu0 0
        %699 = vmatpush1.bf16.msra.mxu0 0
        %700 = vmatprep.subr.bf16.mxu0 0
        %701 = vmatpush1.bf16.msra.mxu0 0
        %702 = vmatprep.subr.bf16.mxu0 0
        %703 = vmatpush1.bf16.msra.mxu0 0
        %704 = vmatprep.subr.bf16.mxu0 0
        %705 = vmatpush1.bf16.msra.mxu0 0
        %706 = vmatprep.subr.bf16.mxu0 0
        %707 = vmatpush1.bf16.msra.mxu0 0
        %708 = vmatprep.subr.bf16.mxu0 0
        %709 = vmatpush1.bf16.msra.mxu0 0
        %710 = vmatprep.subr.bf16.mxu0 0
        %711 = vmatpush1.bf16.msra.mxu0 0
        %712 = vmatprep.subr.bf16.mxu0 0
        %713 = vmatpush1.bf16.msra.mxu0 0
        %714 = vmatprep.subr.bf16.mxu0 0
        %715 = vmatpush1.bf16.msra.mxu0 0
        %716 = vmatprep.subr.bf16.mxu0 0
        %717 = vmatpush1.bf16.msra.mxu0 0
        %718 = vmatprep.subr.bf16.mxu0 0
        %719 = vmatpush1.bf16.msra.mxu0 0
        %720 = vmatprep.subr.bf16.mxu0 0
        %721 = vmatpush1.bf16.msra.mxu0 0
        %722 = vmatprep.subr.bf16.mxu0 0
        %723 = vmatpush1.bf16.msra.mxu0 0
        %724 = vmatprep.mubr.bf16.mxu0 0
        %725 = vmatmul.mubr.bf16.gmra.mrb[0].mxu0 %v690
        %v726 = vpop.f32.mrb[0].mxu0
        %v727 = vadd.f32 %v685, %v726
        %v728 = vpop.f32.mrb[0].mxu0
        %v729 = vpop.f32.mrb[0].mxu0
        %v730 = vpop.f32.mrb[0].mxu0
        %731 = vdwg.mxu0
        %v732 = vxor.u32 %v677, 2147483648
        %v733 = vmul.f32 %v732, 1.442695
        %v734 = vpow.pop %v733
        %v735 = vadd.f32 %v734, 1.0
        %v736 = vrcp.pop %v735
        %v737 = vmul.f32 1.0, %v736
        %v738 = vtanh.pop %v677
        %v739 = vmul.f32 %v737, %v623
        %741 = vrot.lane.b32.xlu0 %v738, 32
        %v742 = vpop.permute.xlu0 %741
        %v744 = vmul.f32 %v737, %v742
        %746 = vrot.lane.b32.xlu0 %v744, 32
        %v747 = vpop.permute.xlu0 %746
        %v749 = vadd.f32 %v739, %v747
        %v750 = vtanh.pop %v749
        %752 = vrot.lane.b32.xlu0 %v750, 32
        %v753 = vpop.permute.xlu0 %752
        %v755 = vmul.f32 %v737, %v753
        %v756 = vxor.u32 %v727, 2147483648
        %v757 = vmul.f32 %v756, 1.442695
        %v758 = vpow.pop %v757
        %v759 = vadd.f32 %v758, 1.0
        %v760 = vrcp.pop %v759
        %v761 = vmul.f32 1.0, %v760
        %v762 = vtanh.pop %v727
        %v763 = vmul.f32 %v761, %v630
        %765 = vrot.lane.b32.xlu0 %v762, 32
        %v766 = vpop.permute.xlu0 %765
        %v768 = vmul.f32 %v761, %v766
        %770 = vrot.lane.b32.xlu0 %v768, 32
        %v771 = vpop.permute.xlu0 %770
        %v773 = vadd.f32 %v763, %v771
        %v774 = vtanh.pop %v773
        %776 = vrot.lane.b32.xlu0 %v774, 32
        %v777 = vpop.permute.xlu0 %776
        %v779 = vmul.f32 %v761, %v777
        %v780 = vstv %s631
        %vm781 = vcmp.gt.s32.totalorder %v261, %v780
        %vm782 = vcmp.le.s32.totalorder %v261, %v780
        %v783 = vsel %vm781, 1, 0
        %784 = vset.pattern.permute.xlu0 0
        %785 = vperm.xlu0 %784, %v783
        %v786 = vpop.permute.xlu0 %785
        %vm787 = vcmp.eq.s32.totalorder %v786, 1
        %v788 = vsel %vm787, %v755, %v622
        %v789 = vsel %vm787, %v749, %v623
        %v790 = vsel %vm782, 1, 0
        %791 = vset.pattern.permute.xlu0 1
        %792 = vperm.xlu0 %791, %v790
        %v793 = vpop.permute.xlu0 %792
        %vm794 = vcmp.eq.s32.totalorder %v793, 1
        %v795 = vsel %vm794, %v779, %v629
        %v796 = vsel %vm794, %v773, %v630
        %s797 = sadd.s32 %s243, 3
        %v798 = vpack.c.bf16 %v788, %v788
        %s799 = scalar_lea.vmem %s232, 6
        %v800 = vld [vmem:[%s799] sm:$0x3]
        %v801 = vunpack.c.l.bf16 %v800
        %803 = vrot.lane.b32.xlu0 %v798, 64
        %v804 = vpop.permute.xlu0 %803
        %v806 = vsel %vm281, %v804, 0
        %808 = vmatprep.subr.bf16.mxu0 0
        %809 = vmatpush1.bf16.msra.mxu0 %v277
        %810 = vmatprep.subr.bf16.mxu0 0
        %811 = vmatpush1.bf16.msra.mxu0 %v278
        %812 = vmatprep.subr.bf16.mxu0 0
        %813 = vmatpush1.bf16.msra.mxu0 0
        %814 = vmatprep.subr.bf16.mxu0 0
        %815 = vmatpush1.bf16.msra.mxu0 0
        %816 = vmatprep.subr.bf16.mxu0 0
        %817 = vmatpush1.bf16.msra.mxu0 0
        %818 = vmatprep.subr.bf16.mxu0 0
        %819 = vmatpush1.bf16.msra.mxu0 0
        %820 = vmatprep.subr.bf16.mxu0 0
        %821 = vmatpush1.bf16.msra.mxu0 0
        %822 = vmatprep.subr.bf16.mxu0 0
        %823 = vmatpush1.bf16.msra.mxu0 0
        %824 = vmatprep.subr.bf16.mxu0 0
        %825 = vmatpush1.bf16.msra.mxu0 0
        %826 = vmatprep.subr.bf16.mxu0 0
        %827 = vmatpush1.bf16.msra.mxu0 0
        %828 = vmatprep.subr.bf16.mxu0 0
        %829 = vmatpush1.bf16.msra.mxu0 0
        %830 = vmatprep.subr.bf16.mxu0 0
        %831 = vmatpush1.bf16.msra.mxu0 0
        %832 = vmatprep.subr.bf16.mxu0 0
        %833 = vmatpush1.bf16.msra.mxu0 0
        %834 = vmatprep.subr.bf16.mxu0 0
        %835 = vmatpush1.bf16.msra.mxu0 0
        %836 = vmatprep.subr.bf16.mxu0 0
        %837 = vmatpush1.bf16.msra.mxu0 0
        %838 = vmatprep.subr.bf16.mxu0 0
        %839 = vmatpush1.bf16.msra.mxu0 0
        %840 = vmatprep.mubr.bf16.mxu0 0
        %841 = vmatmul.mubr.bf16.gmra.mrb[0].mxu0 %v806
        %v842 = vpop.f32.mrb[0].mxu0
        %v843 = vadd.f32 %v801, %v842
        %v844 = vpop.f32.mrb[0].mxu0
        %v845 = vpop.f32.mrb[0].mxu0
        %v846 = vpop.f32.mrb[0].mxu0
        %847 = vdwg.mxu0
        %v848 = vpack.c.bf16 %v795, %v795
        %s849 = scalar_lea.vmem %s239, 8
        %v850 = vld [vmem:[%s849] sm:$0x3]
        %v851 = vunpack.c.l.bf16 %v850
        %853 = vrot.lane.b32.xlu0 %v848, 64
        %v854 = vpop.permute.xlu0 %853
        %v856 = vsel %vm281, %v854, 0
        %858 = vmatprep.subr.bf16.mxu0 0
        %859 = vmatpush1.bf16.msra.mxu0 %v337
        %860 = vmatprep.subr.bf16.mxu0 0
        %861 = vmatpush1.bf16.msra.mxu0 %v338
        %862 = vmatprep.subr.bf16.mxu0 0
        %863 = vmatpush1.bf16.msra.mxu0 0
        %864 = vmatprep.subr.bf16.mxu0 0
        %865 = vmatpush1.bf16.msra.mxu0 0
        %866 = vmatprep.subr.bf16.mxu0 0
        %867 = vmatpush1.bf16.msra.mxu0 0
        %868 = vmatprep.subr.bf16.mxu0 0
        %869 = vmatpush1.bf16.msra.mxu0 0
        %870 = vmatprep.subr.bf16.mxu0 0
        %871 = vmatpush1.bf16.msra.mxu0 0
        %872 = vmatprep.subr.bf16.mxu0 0
        %873 = vmatpush1.bf16.msra.mxu0 0
        %874 = vmatprep.subr.bf16.mxu0 0
        %875 = vmatpush1.bf16.msra.mxu0 0
        %876 = vmatprep.subr.bf16.mxu0 0
        %877 = vmatpush1.bf16.msra.mxu0 0
        %878 = vmatprep.subr.bf16.mxu0 0
        %879 = vmatpush1.bf16.msra.mxu0 0
        %880 = vmatprep.subr.bf16.mxu0 0
        %881 = vmatpush1.bf16.msra.mxu0 0
        %882 = vmatprep.subr.bf16.mxu0 0
        %883 = vmatpush1.bf16.msra.mxu0 0
        %884 = vmatprep.subr.bf16.mxu0 0
        %885 = vmatpush1.bf16.msra.mxu0 0
        %886 = vmatprep.subr.bf16.mxu0 0
        %887 = vmatpush1.bf16.msra.mxu0 0
        %888 = vmatprep.subr.bf16.mxu0 0
        %889 = vmatpush1.bf16.msra.mxu0 0
        %890 = vmatprep.mubr.bf16.mxu0 0
        %891 = vmatmul.mubr.bf16.gmra.mrb[0].mxu0 %v856
        %v892 = vpop.f32.mrb[0].mxu0
        %v893 = vadd.f32 %v851, %v892
        %v894 = vpop.f32.mrb[0].mxu0
        %v895 = vpop.f32.mrb[0].mxu0
        %v896 = vpop.f32.mrb[0].mxu0
        %897 = vdwg.mxu0
        %v898 = vxor.u32 %v843, 2147483648
        %v899 = vmul.f32 %v898, 1.442695
        %v900 = vpow.pop %v899
        %v901 = vadd.f32 %v900, 1.0
        %v902 = vrcp.pop %v901
        %v903 = vmul.f32 1.0, %v902
        %v904 = vtanh.pop %v843
        %v905 = vmul.f32 %v903, %v789
        %907 = vrot.lane.b32.xlu0 %v904, 32
        %v908 = vpop.permute.xlu0 %907
        %v910 = vmul.f32 %v903, %v908
        %912 = vrot.lane.b32.xlu0 %v910, 32
        %v913 = vpop.permute.xlu0 %912
        %v915 = vadd.f32 %v905, %v913
        %v916 = vtanh.pop %v915
        %918 = vrot.lane.b32.xlu0 %v916, 32
        %v919 = vpop.permute.xlu0 %918
        %v921 = vmul.f32 %v903, %v919
        %v922 = vxor.u32 %v893, 2147483648
        %v923 = vmul.f32 %v922, 1.442695
        %v924 = vpow.pop %v923
        %v925 = vadd.f32 %v924, 1.0
        %v926 = vrcp.pop %v925
        %v927 = vmul.f32 1.0, %v926
        %v928 = vtanh.pop %v893
        %v929 = vmul.f32 %v927, %v796
        %931 = vrot.lane.b32.xlu0 %v928, 32
        %v932 = vpop.permute.xlu0 %931
        %v934 = vmul.f32 %v927, %v932
        %936 = vrot.lane.b32.xlu0 %v934, 32
        %v937 = vpop.permute.xlu0 %936
        %v939 = vadd.f32 %v929, %v937
        %v940 = vtanh.pop %v939
        %942 = vrot.lane.b32.xlu0 %v940, 32
        %v943 = vpop.permute.xlu0 %942
        %v945 = vmul.f32 %v927, %v943
        %v946 = vstv %s797
        %vm947 = vcmp.gt.s32.totalorder %v261, %v946
        %vm948 = vcmp.le.s32.totalorder %v261, %v946
        %v949 = vsel %vm947, 1, 0
        %950 = vset.pattern.permute.xlu0 0
        %951 = vperm.xlu0 %950, %v949
        %v952 = vpop.permute.xlu0 %951
        %vm953 = vcmp.eq.s32.totalorder %v952, 1
        %v954 = vsel %vm953, %v921, %v788
        %v955 = vsel %vm953, %v915, %v789
        %v956 = vsel %vm948, 1, 0
        %957 = vset.pattern.permute.xlu0 1
        %958 = vperm.xlu0 %957, %v956
        %v959 = vpop.permute.xlu0 %958
        %vm960 = vcmp.eq.s32.totalorder %v959, 1
        %v961 = vsel %vm960, %v945, %v795
        %v962 = vsel %vm960, %v939, %v796
        %s963 = sadd.s32 %s243, 4
        %v964 = vpack.c.bf16 %v954, %v954
        %s965 = scalar_lea.vmem %s232, 8
        %v966 = vld [vmem:[%s965] sm:$0x3]
        %v967 = vunpack.c.l.bf16 %v966
        %969 = vrot.lane.b32.xlu0 %v964, 64
        %v970 = vpop.permute.xlu0 %969
        %v972 = vsel %vm281, %v970, 0
        %974 = vmatprep.subr.bf16.mxu0 0
        %975 = vmatpush1.bf16.msra.mxu0 %v277
        %976 = vmatprep.subr.bf16.mxu0 0
        %977 = vmatpush1.bf16.msra.mxu0 %v278
        %978 = vmatprep.subr.bf16.mxu0 0
        %979 = vmatpush1.bf16.msra.mxu0 0
        %980 = vmatprep.subr.bf16.mxu0 0
        %981 = vmatpush1.bf16.msra.mxu0 0
        %982 = vmatprep.subr.bf16.mxu0 0
        %983 = vmatpush1.bf16.msra.mxu0 0
        %984 = vmatprep.subr.bf16.mxu0 0
        %985 = vmatpush1.bf16.msra.mxu0 0
        %986 = vmatprep.subr.bf16.mxu0 0
        %987 = vmatpush1.bf16.msra.mxu0 0
        %988 = vmatprep.subr.bf16.mxu0 0
        %989 = vmatpush1.bf16.msra.mxu0 0
        %990 = vmatprep.subr.bf16.mxu0 0
        %991 = vmatpush1.bf16.msra.mxu0 0
        %992 = vmatprep.subr.bf16.mxu0 0
        %993 = vmatpush1.bf16.msra.mxu0 0
        %994 = vmatprep.subr.bf16.mxu0 0
        %995 = vmatpush1.bf16.msra.mxu0 0
        %996 = vmatprep.subr.bf16.mxu0 0
        %997 = vmatpush1.bf16.msra.mxu0 0
        %998 = vmatprep.subr.bf16.mxu0 0
        %999 = vmatpush1.bf16.msra.mxu0 0
        %1000 = vmatprep.subr.bf16.mxu0 0
        %1001 = vmatpush1.bf16.msra.mxu0 0
        %1002 = vmatprep.subr.bf16.mxu0 0
        %1003 = vmatpush1.bf16.msra.mxu0 0
        %1004 = vmatprep.subr.bf16.mxu0 0
        %1005 = vmatpush1.bf16.msra.mxu0 0
        %1006 = vmatprep.mubr.bf16.mxu0 0
        %1007 = vmatmul.mubr.bf16.gmra.mrb[0].mxu0 %v972
        %v1008 = vpop.f32.mrb[0].mxu0
        %v1009 = vadd.f32 %v967, %v1008
        %v1010 = vpop.f32.mrb[0].mxu0
        %v1011 = vpop.f32.mrb[0].mxu0
        %v1012 = vpop.f32.mrb[0].mxu0
        %1013 = vdwg.mxu0
        %v1014 = vpack.c.bf16 %v961, %v961
        %s1015 = scalar_lea.vmem %s239, 6
        %v1016 = vld [vmem:[%s1015] sm:$0x3]
        %v1017 = vunpack.c.l.bf16 %v1016
        %1019 = vrot.lane.b32.xlu0 %v1014, 64
        %v1020 = vpop.permute.xlu0 %1019
        %v1022 = vsel %vm281, %v1020, 0
        %1024 = vmatprep.subr.bf16.mxu0 0
        %1025 = vmatpush1.bf16.msra.mxu0 %v337
        %1026 = vmatprep.subr.bf16.mxu0 0
        %1027 = vmatpush1.bf16.msra.mxu0 %v338
        %1028 = vmatprep.subr.bf16.mxu0 0
        %1029 = vmatpush1.bf16.msra.mxu0 0
        %1030 = vmatprep.subr.bf16.mxu0 0
        %1031 = vmatpush1.bf16.msra.mxu0 0
        %1032 = vmatprep.subr.bf16.mxu0 0
        %1033 = vmatpush1.bf16.msra.mxu0 0
        %1034 = vmatprep.subr.bf16.mxu0 0
        %1035 = vmatpush1.bf16.msra.mxu0 0
        %1036 = vmatprep.subr.bf16.mxu0 0
        %1037 = vmatpush1.bf16.msra.mxu0 0
        %1038 = vmatprep.subr.bf16.mxu0 0
        %1039 = vmatpush1.bf16.msra.mxu0 0
        %1040 = vmatprep.subr.bf16.mxu0 0
        %1041 = vmatpush1.bf16.msra.mxu0 0
        %1042 = vmatprep.subr.bf16.mxu0 0
        %1043 = vmatpush1.bf16.msra.mxu0 0
        %1044 = vmatprep.subr.bf16.mxu0 0
        %1045 = vmatpush1.bf16.msra.mxu0 0
        %1046 = vmatprep.subr.bf16.mxu0 0
        %1047 = vmatpush1.bf16.msra.mxu0 0
        %1048 = vmatprep.subr.bf16.mxu0 0
        %1049 = vmatpush1.bf16.msra.mxu0 0
        %1050 = vmatprep.subr.bf16.mxu0 0
        %1051 = vmatpush1.bf16.msra.mxu0 0
        %1052 = vmatprep.subr.bf16.mxu0 0
        %1053 = vmatpush1.bf16.msra.mxu0 0
        %1054 = vmatprep.subr.bf16.mxu0 0
        %1055 = vmatpush1.bf16.msra.mxu0 0
        %1056 = vmatprep.mubr.bf16.mxu0 0
        %1057 = vmatmul.mubr.bf16.gmra.mrb[0].mxu0 %v1022
        %v1058 = vpop.f32.mrb[0].mxu0
        %v1059 = vadd.f32 %v1017, %v1058
        %v1060 = vpop.f32.mrb[0].mxu0
        %v1061 = vpop.f32.mrb[0].mxu0
        %v1062 = vpop.f32.mrb[0].mxu0
        %1063 = vdwg.mxu0
        %v1064 = vxor.u32 %v1009, 2147483648
        %v1065 = vmul.f32 %v1064, 1.442695
        %v1066 = vpow.pop %v1065
        %v1067 = vadd.f32 %v1066, 1.0
        %v1068 = vrcp.pop %v1067
        %v1069 = vmul.f32 1.0, %v1068
        %v1070 = vtanh.pop %v1009
        %v1071 = vmul.f32 %v1069, %v955
        %1073 = vrot.lane.b32.xlu0 %v1070, 32
        %v1074 = vpop.permute.xlu0 %1073
        %v1076 = vmul.f32 %v1069, %v1074
        %1078 = vrot.lane.b32.xlu0 %v1076, 32
        %v1079 = vpop.permute.xlu0 %1078
        %v1081 = vadd.f32 %v1071, %v1079
        %v1082 = vtanh.pop %v1081
        %1084 = vrot.lane.b32.xlu0 %v1082, 32
        %v1085 = vpop.permute.xlu0 %1084
        %v1087 = vmul.f32 %v1069, %v1085
        %v1088 = vxor.u32 %v1059, 2147483648
        %v1089 = vmul.f32 %v1088, 1.442695
        %v1090 = vpow.pop %v1089
        %v1091 = vadd.f32 %v1090, 1.0
        %v1092 = vrcp.pop %v1091
        %v1093 = vmul.f32 1.0, %v1092
        %v1094 = vtanh.pop %v1059
        %v1095 = vmul.f32 %v1093, %v962
        %1097 = vrot.lane.b32.xlu0 %v1094, 32
        %v1098 = vpop.permute.xlu0 %1097
        %v1100 = vmul.f32 %v1093, %v1098
        %1102 = vrot.lane.b32.xlu0 %v1100, 32
        %v1103 = vpop.permute.xlu0 %1102
        %v1105 = vadd.f32 %v1095, %v1103
        %v1106 = vtanh.pop %v1105
        %1108 = vrot.lane.b32.xlu0 %v1106, 32
        %v1109 = vpop.permute.xlu0 %1108
        %v1111 = vmul.f32 %v1093, %v1109
        %v1112 = vstv %s963
        %vm1113 = vcmp.gt.s32.totalorder %v261, %v1112
        %vm1114 = vcmp.le.s32.totalorder %v261, %v1112
        %v1115 = vsel %vm1113, 1, 0
        %1116 = vset.pattern.permute.xlu0 0
        %1117 = vperm.xlu0 %1116, %v1115
        %v1118 = vpop.permute.xlu0 %1117
        %vm1119 = vcmp.eq.s32.totalorder %v1118, 1
        %v1120 = vsel %vm1119, %v1087, %v954
        %v1121 = vsel %vm1119, %v1081, %v955
        %v1122 = vsel %vm1114, 1, 0
        %1123 = vset.pattern.permute.xlu0 1
        %1124 = vperm.xlu0 %1123, %v1122
        %v1125 = vpop.permute.xlu0 %1124
        %vm1126 = vcmp.eq.s32.totalorder %v1125, 1
        %v1127 = vsel %vm1126, %v1111, %v961
        %v1128 = vsel %vm1126, %v1105, %v962
        %s1129 = sadd.s32 %s243, 5
        %v1130 = vpack.c.bf16 %v1120, %v1120
        %s1131 = scalar_lea.vmem %s232, 10
        %v1132 = vld [vmem:[%s1131] sm:$0x3]
        %v1133 = vunpack.c.l.bf16 %v1132
        %1135 = vrot.lane.b32.xlu0 %v1130, 64
        %v1136 = vpop.permute.xlu0 %1135
        %v1138 = vsel %vm281, %v1136, 0
        %1140 = vmatprep.subr.bf16.mxu0 0
        %1141 = vmatpush1.bf16.msra.mxu0 %v277
        %1142 = vmatprep.subr.bf16.mxu0 0
        %1143 = vmatpush1.bf16.msra.mxu0 %v278
        %1144 = vmatprep.subr.bf16.mxu0 0
        %1145 = vmatpush1.bf16.msra.mxu0 0
        %1146 = vmatprep.subr.bf16.mxu0 0
        %1147 = vmatpush1.bf16.msra.mxu0 0
        %1148 = vmatprep.subr.bf16.mxu0 0
        %1149 = vmatpush1.bf16.msra.mxu0 0
        %1150 = vmatprep.subr.bf16.mxu0 0
        %1151 = vmatpush1.bf16.msra.mxu0 0
        %1152 = vmatprep.subr.bf16.mxu0 0
        %1153 = vmatpush1.bf16.msra.mxu0 0
        %1154 = vmatprep.subr.bf16.mxu0 0
        %1155 = vmatpush1.bf16.msra.mxu0 0
        %1156 = vmatprep.subr.bf16.mxu0 0
        %1157 = vmatpush1.bf16.msra.mxu0 0
        %1158 = vmatprep.subr.bf16.mxu0 0
        %1159 = vmatpush1.bf16.msra.mxu0 0
        %1160 = vmatprep.subr.bf16.mxu0 0
        %1161 = vmatpush1.bf16.msra.mxu0 0
        %1162 = vmatprep.subr.bf16.mxu0 0
        %1163 = vmatpush1.bf16.msra.mxu0 0
        %1164 = vmatprep.subr.bf16.mxu0 0
        %1165 = vmatpush1.bf16.msra.mxu0 0
        %1166 = vmatprep.subr.bf16.mxu0 0
        %1167 = vmatpush1.bf16.msra.mxu0 0
        %1168 = vmatprep.subr.bf16.mxu0 0
        %1169 = vmatpush1.bf16.msra.mxu0 0
        %1170 = vmatprep.subr.bf16.mxu0 0
        %1171 = vmatpush1.bf16.msra.mxu0 0
        %1172 = vmatprep.mubr.bf16.mxu0 0
        %1173 = vmatmul.mubr.bf16.gmra.mrb[0].mxu0 %v1138
        %v1174 = vpop.f32.mrb[0].mxu0
        %v1175 = vadd.f32 %v1133, %v1174
        %v1176 = vpop.f32.mrb[0].mxu0
        %v1177 = vpop.f32.mrb[0].mxu0
        %v1178 = vpop.f32.mrb[0].mxu0
        %1179 = vdwg.mxu0
        %v1180 = vpack.c.bf16 %v1127, %v1127
        %s1181 = scalar_lea.vmem %s239, 4
        %v1182 = vld [vmem:[%s1181] sm:$0x3]
        %v1183 = vunpack.c.l.bf16 %v1182
        %1185 = vrot.lane.b32.xlu0 %v1180, 64
        %v1186 = vpop.permute.xlu0 %1185
        %v1188 = vsel %vm281, %v1186, 0
        %1190 = vmatprep.subr.bf16.mxu0 0
        %1191 = vmatpush1.bf16.msra.mxu0 %v337
        %1192 = vmatprep.subr.bf16.mxu0 0
        %1193 = vmatpush1.bf16.msra.mxu0 %v338
        %1194 = vmatprep.subr.bf16.mxu0 0
        %1195 = vmatpush1.bf16.msra.mxu0 0
        %1196 = vmatprep.subr.bf16.mxu0 0
        %1197 = vmatpush1.bf16.msra.mxu0 0
        %1198 = vmatprep.subr.bf16.mxu0 0
        %1199 = vmatpush1.bf16.msra.mxu0 0
        %1200 = vmatprep.subr.bf16.mxu0 0
        %1201 = vmatpush1.bf16.msra.mxu0 0
        %1202 = vmatprep.subr.bf16.mxu0 0
        %1203 = vmatpush1.bf16.msra.mxu0 0
        %1204 = vmatprep.subr.bf16.mxu0 0
        %1205 = vmatpush1.bf16.msra.mxu0 0
        %1206 = vmatprep.subr.bf16.mxu0 0
        %1207 = vmatpush1.bf16.msra.mxu0 0
        %1208 = vmatprep.subr.bf16.mxu0 0
        %1209 = vmatpush1.bf16.msra.mxu0 0
        %1210 = vmatprep.subr.bf16.mxu0 0
        %1211 = vmatpush1.bf16.msra.mxu0 0
        %1212 = vmatprep.subr.bf16.mxu0 0
        %1213 = vmatpush1.bf16.msra.mxu0 0
        %1214 = vmatprep.subr.bf16.mxu0 0
        %1215 = vmatpush1.bf16.msra.mxu0 0
        %1216 = vmatprep.subr.bf16.mxu0 0
        %1217 = vmatpush1.bf16.msra.mxu0 0
        %1218 = vmatprep.subr.bf16.mxu0 0
        %1219 = vmatpush1.bf16.msra.mxu0 0
        %1220 = vmatprep.subr.bf16.mxu0 0
        %1221 = vmatpush1.bf16.msra.mxu0 0
        %1222 = vmatprep.mubr.bf16.mxu0 0
        %1223 = vmatmul.mubr.bf16.gmra.mrb[0].mxu0 %v1188
        %v1224 = vpop.f32.mrb[0].mxu0
        %v1225 = vadd.f32 %v1183, %v1224
        %v1226 = vpop.f32.mrb[0].mxu0
        %v1227 = vpop.f32.mrb[0].mxu0
        %v1228 = vpop.f32.mrb[0].mxu0
        %1229 = vdwg.mxu0
        %v1230 = vxor.u32 %v1175, 2147483648
        %v1231 = vmul.f32 %v1230, 1.442695
        %v1232 = vpow.pop %v1231
        %v1233 = vadd.f32 %v1232, 1.0
        %v1234 = vrcp.pop %v1233
        %v1235 = vmul.f32 1.0, %v1234
        %v1236 = vtanh.pop %v1175
        %v1237 = vmul.f32 %v1235, %v1121
        %1239 = vrot.lane.b32.xlu0 %v1236, 32
        %v1240 = vpop.permute.xlu0 %1239
        %v1242 = vmul.f32 %v1235, %v1240
        %1244 = vrot.lane.b32.xlu0 %v1242, 32
        %v1245 = vpop.permute.xlu0 %1244
        %v1247 = vadd.f32 %v1237, %v1245
        %v1248 = vtanh.pop %v1247
        %1250 = vrot.lane.b32.xlu0 %v1248, 32
        %v1251 = vpop.permute.xlu0 %1250
        %v1253 = vmul.f32 %v1235, %v1251
        %v1254 = vxor.u32 %v1225, 2147483648
        %v1255 = vmul.f32 %v1254, 1.442695
        %v1256 = vpow.pop %v1255
        %v1257 = vadd.f32 %v1256, 1.0
        %v1258 = vrcp.pop %v1257
        %v1259 = vmul.f32 1.0, %v1258
        %v1260 = vtanh.pop %v1225
        %v1261 = vmul.f32 %v1259, %v1128
        %1263 = vrot.lane.b32.xlu0 %v1260, 32
        %v1264 = vpop.permute.xlu0 %1263
        %v1266 = vmul.f32 %v1259, %v1264
        %1268 = vrot.lane.b32.xlu0 %v1266, 32
        %v1269 = vpop.permute.xlu0 %1268
        %v1271 = vadd.f32 %v1261, %v1269
        %v1272 = vtanh.pop %v1271
        %1274 = vrot.lane.b32.xlu0 %v1272, 32
        %v1275 = vpop.permute.xlu0 %1274
        %v1277 = vmul.f32 %v1259, %v1275
        %v1278 = vstv %s1129
        %vm1279 = vcmp.gt.s32.totalorder %v261, %v1278
        %vm1280 = vcmp.le.s32.totalorder %v261, %v1278
        %v1281 = vsel %vm1279, 1, 0
        %1282 = vset.pattern.permute.xlu0 0
        %1283 = vperm.xlu0 %1282, %v1281
        %v1284 = vpop.permute.xlu0 %1283
        %vm1285 = vcmp.eq.s32.totalorder %v1284, 1
        %v1286 = vsel %vm1285, %v1253, %v1120
        %v1287 = vsel %vm1285, %v1247, %v1121
        %v1288 = vsel %vm1280, 1, 0
        %1289 = vset.pattern.permute.xlu0 1
        %1290 = vperm.xlu0 %1289, %v1288
        %v1291 = vpop.permute.xlu0 %1290
        %vm1292 = vcmp.eq.s32.totalorder %v1291, 1
        %v1293 = vsel %vm1292, %v1277, %v1127
        %v1294 = vsel %vm1292, %v1271, %v1128
        %s1295 = sadd.s32 %s243, 6
        %v1296 = vpack.c.bf16 %v1286, %v1286
        %s1297 = scalar_lea.vmem %s232, 12
        %v1298 = vld [vmem:[%s1297] sm:$0x3]
        %v1299 = vunpack.c.l.bf16 %v1298
        %1301 = vrot.lane.b32.xlu0 %v1296, 64
        %v1302 = vpop.permute.xlu0 %1301
        %v1304 = vsel %vm281, %v1302, 0
        %1306 = vmatprep.subr.bf16.mxu0 0
        %1307 = vmatpush1.bf16.msra.mxu0 %v277
        %1308 = vmatprep.subr.bf16.mxu0 0
        %1309 = vmatpush1.bf16.msra.mxu0 %v278
        %1310 = vmatprep.subr.bf16.mxu0 0
        %1311 = vmatpush1.bf16.msra.mxu0 0
        %1312 = vmatprep.subr.bf16.mxu0 0
        %1313 = vmatpush1.bf16.msra.mxu0 0
        %1314 = vmatprep.subr.bf16.mxu0 0
        %1315 = vmatpush1.bf16.msra.mxu0 0
        %1316 = vmatprep.subr.bf16.mxu0 0
        %1317 = vmatpush1.bf16.msra.mxu0 0
        %1318 = vmatprep.subr.bf16.mxu0 0
        %1319 = vmatpush1.bf16.msra.mxu0 0
        %1320 = vmatprep.subr.bf16.mxu0 0
        %1321 = vmatpush1.bf16.msra.mxu0 0
        %1322 = vmatprep.subr.bf16.mxu0 0
        %1323 = vmatpush1.bf16.msra.mxu0 0
        %1324 = vmatprep.subr.bf16.mxu0 0
        %1325 = vmatpush1.bf16.msra.mxu0 0
        %1326 = vmatprep.subr.bf16.mxu0 0
        %1327 = vmatpush1.bf16.msra.mxu0 0
        %1328 = vmatprep.subr.bf16.mxu0 0
        %1329 = vmatpush1.bf16.msra.mxu0 0
        %1330 = vmatprep.subr.bf16.mxu0 0
        %1331 = vmatpush1.bf16.msra.mxu0 0
        %1332 = vmatprep.subr.bf16.mxu0 0
        %1333 = vmatpush1.bf16.msra.mxu0 0
        %1334 = vmatprep.subr.bf16.mxu0 0
        %1335 = vmatpush1.bf16.msra.mxu0 0
        %1336 = vmatprep.subr.bf16.mxu0 0
        %1337 = vmatpush1.bf16.msra.mxu0 0
        %1338 = vmatprep.mubr.bf16.mxu0 0
        %1339 = vmatmul.mubr.bf16.gmra.mrb[0].mxu0 %v1304
        %v1340 = vpop.f32.mrb[0].mxu0
        %v1341 = vadd.f32 %v1299, %v1340
        %v1342 = vpop.f32.mrb[0].mxu0
        %v1343 = vpop.f32.mrb[0].mxu0
        %v1344 = vpop.f32.mrb[0].mxu0
        %1345 = vdwg.mxu0
        %v1346 = vpack.c.bf16 %v1293, %v1293
        %s1347 = scalar_lea.vmem %s239, 2
        %v1348 = vld [vmem:[%s1347] sm:$0x3]
        %v1349 = vunpack.c.l.bf16 %v1348
        %1351 = vrot.lane.b32.xlu0 %v1346, 64
        %v1352 = vpop.permute.xlu0 %1351
        %v1354 = vsel %vm281, %v1352, 0
        %1356 = vmatprep.subr.bf16.mxu0 0
        %1357 = vmatpush1.bf16.msra.mxu0 %v337
        %1358 = vmatprep.subr.bf16.mxu0 0
        %1359 = vmatpush1.bf16.msra.mxu0 %v338
        %1360 = vmatprep.subr.bf16.mxu0 0
        %1361 = vmatpush1.bf16.msra.mxu0 0
        %1362 = vmatprep.subr.bf16.mxu0 0
        %1363 = vmatpush1.bf16.msra.mxu0 0
        %1364 = vmatprep.subr.bf16.mxu0 0
        %1365 = vmatpush1.bf16.msra.mxu0 0
        %1366 = vmatprep.subr.bf16.mxu0 0
        %1367 = vmatpush1.bf16.msra.mxu0 0
        %1368 = vmatprep.subr.bf16.mxu0 0
        %1369 = vmatpush1.bf16.msra.mxu0 0
        %1370 = vmatprep.subr.bf16.mxu0 0
        %1371 = vmatpush1.bf16.msra.mxu0 0
        %1372 = vmatprep.subr.bf16.mxu0 0
        %1373 = vmatpush1.bf16.msra.mxu0 0
        %1374 = vmatprep.subr.bf16.mxu0 0
        %1375 = vmatpush1.bf16.msra.mxu0 0
        %1376 = vmatprep.subr.bf16.mxu0 0
        %1377 = vmatpush1.bf16.msra.mxu0 0
        %1378 = vmatprep.subr.bf16.mxu0 0
        %1379 = vmatpush1.bf16.msra.mxu0 0
        %1380 = vmatprep.subr.bf16.mxu0 0
        %1381 = vmatpush1.bf16.msra.mxu0 0
        %1382 = vmatprep.subr.bf16.mxu0 0
        %1383 = vmatpush1.bf16.msra.mxu0 0
        %1384 = vmatprep.subr.bf16.mxu0 0
        %1385 = vmatpush1.bf16.msra.mxu0 0
        %1386 = vmatprep.subr.bf16.mxu0 0
        %1387 = vmatpush1.bf16.msra.mxu0 0
        %1388 = vmatprep.mubr.bf16.mxu0 0
        %1389 = vmatmul.mubr.bf16.gmra.mrb[0].mxu0 %v1354
        %v1390 = vpop.f32.mrb[0].mxu0
        %v1391 = vadd.f32 %v1349, %v1390
        %v1392 = vpop.f32.mrb[0].mxu0
        %v1393 = vpop.f32.mrb[0].mxu0
        %v1394 = vpop.f32.mrb[0].mxu0
        %1395 = vdwg.mxu0
        %v1396 = vxor.u32 %v1341, 2147483648
        %v1397 = vmul.f32 %v1396, 1.442695
        %v1398 = vpow.pop %v1397
        %v1399 = vadd.f32 %v1398, 1.0
        %v1400 = vrcp.pop %v1399
        %v1401 = vmul.f32 1.0, %v1400
        %v1402 = vtanh.pop %v1341
        %v1403 = vmul.f32 %v1401, %v1287
        %1405 = vrot.lane.b32.xlu0 %v1402, 32
        %v1406 = vpop.permute.xlu0 %1405
        %v1408 = vmul.f32 %v1401, %v1406
        %1410 = vrot.lane.b32.xlu0 %v1408, 32
        %v1411 = vpop.permute.xlu0 %1410
        %v1413 = vadd.f32 %v1403, %v1411
        %v1414 = vtanh.pop %v1413
        %1416 = vrot.lane.b32.xlu0 %v1414, 32
        %v1417 = vpop.permute.xlu0 %1416
        %v1419 = vmul.f32 %v1401, %v1417
        %v1420 = vxor.u32 %v1391, 2147483648
        %v1421 = vmul.f32 %v1420, 1.442695
        %v1422 = vpow.pop %v1421
        %v1423 = vadd.f32 %v1422, 1.0
        %v1424 = vrcp.pop %v1423
        %v1425 = vmul.f32 1.0, %v1424
        %v1426 = vtanh.pop %v1391
        %v1427 = vmul.f32 %v1425, %v1294
        %1429 = vrot.lane.b32.xlu0 %v1426, 32
        %v1430 = vpop.permute.xlu0 %1429
        %v1432 = vmul.f32 %v1425, %v1430
        %1434 = vrot.lane.b32.xlu0 %v1432, 32
        %v1435 = vpop.permute.xlu0 %1434
        %v1437 = vadd.f32 %v1427, %v1435
        %v1438 = vtanh.pop %v1437
        %1440 = vrot.lane.b32.xlu0 %v1438, 32
        %v1441 = vpop.permute.xlu0 %1440
        %v1443 = vmul.f32 %v1425, %v1441
        %v1444 = vstv %s1295
        %vm1445 = vcmp.gt.s32.totalorder %v261, %v1444
        %vm1446 = vcmp.le.s32.totalorder %v261, %v1444
        %v1447 = vsel %vm1445, 1, 0
        %1448 = vset.pattern.permute.xlu0 0
        %1449 = vperm.xlu0 %1448, %v1447
        %v1450 = vpop.permute.xlu0 %1449
        %vm1451 = vcmp.eq.s32.totalorder %v1450, 1
        %v1452 = vsel %vm1451, %v1419, %v1286
        %v1453 = vsel %vm1451, %v1413, %v1287
        %v1454 = vsel %vm1446, 1, 0
        %1455 = vset.pattern.permute.xlu0 1
        %1456 = vperm.xlu0 %1455, %v1454
        %v1457 = vpop.permute.xlu0 %1456
        %vm1458 = vcmp.eq.s32.totalorder %v1457, 1
        %v1459 = vsel %vm1458, %v1443, %v1293
        %v1460 = vsel %vm1458, %v1437, %v1294
        %s1461 = sadd.s32 %s243, 7
        %v1462 = vpack.c.bf16 %v1452, %v1452
        %s1463 = scalar_lea.vmem %s232, 14
        %v1464 = vld [vmem:[%s1463] sm:$0x3]
        %v1465 = vunpack.c.l.bf16 %v1464
        %1467 = vrot.lane.b32.xlu0 %v1462, 64
        %v1468 = vpop.permute.xlu0 %1467
        %v1470 = vsel %vm281, %v1468, 0
        %1472 = vmatprep.subr.bf16.mxu0 0
        %1473 = vmatpush1.bf16.msra.mxu0 %v277
        %1474 = vmatprep.subr.bf16.mxu0 0
        %1475 = vmatpush1.bf16.msra.mxu0 %v278
        %1476 = vmatprep.subr.bf16.mxu0 0
        %1477 = vmatpush1.bf16.msra.mxu0 0
        %1478 = vmatprep.subr.bf16.mxu0 0
        %1479 = vmatpush1.bf16.msra.mxu0 0
        %1480 = vmatprep.subr.bf16.mxu0 0
        %1481 = vmatpush1.bf16.msra.mxu0 0
        %1482 = vmatprep.subr.bf16.mxu0 0
        %1483 = vmatpush1.bf16.msra.mxu0 0
        %1484 = vmatprep.subr.bf16.mxu0 0
        %1485 = vmatpush1.bf16.msra.mxu0 0
        %1486 = vmatprep.subr.bf16.mxu0 0
        %1487 = vmatpush1.bf16.msra.mxu0 0
        %1488 = vmatprep.subr.bf16.mxu0 0
        %1489 = vmatpush1.bf16.msra.mxu0 0
        %1490 = vmatprep.subr.bf16.mxu0 0
        %1491 = vmatpush1.bf16.msra.mxu0 0
        %1492 = vmatprep.subr.bf16.mxu0 0
        %1493 = vmatpush1.bf16.msra.mxu0 0
        %1494 = vmatprep.subr.bf16.mxu0 0
        %1495 = vmatpush1.bf16.msra.mxu0 0
        %1496 = vmatprep.subr.bf16.mxu0 0
        %1497 = vmatpush1.bf16.msra.mxu0 0
        %1498 = vmatprep.subr.bf16.mxu0 0
        %1499 = vmatpush1.bf16.msra.mxu0 0
        %1500 = vmatprep.subr.bf16.mxu0 0
        %1501 = vmatpush1.bf16.msra.mxu0 0
        %1502 = vmatprep.subr.bf16.mxu0 0
        %1503 = vmatpush1.bf16.msra.mxu0 0
        %1504 = vmatprep.mubr.bf16.mxu0 0
        %1505 = vmatmul.mubr.bf16.gmra.mrb[0].mxu0 %v1470
        %v1506 = vpop.f32.mrb[0].mxu0
        %v1507 = vadd.f32 %v1465, %v1506
        %v1508 = vpop.f32.mrb[0].mxu0
        %v1509 = vpop.f32.mrb[0].mxu0
        %v1510 = vpop.f32.mrb[0].mxu0
        %1511 = vdwg.mxu0
        %v1512 = vpack.c.bf16 %v1459, %v1459
        %v1513 = vld [vmem:[%s239] sm:$0x3]
        %v1514 = vunpack.c.l.bf16 %v1513
        %1516 = vrot.lane.b32.xlu0 %v1512, 64
        %v1517 = vpop.permute.xlu0 %1516
        %v1519 = vsel %vm281, %v1517, 0
        %1521 = vmatprep.subr.bf16.mxu0 0
        %1522 = vmatpush1.bf16.msra.mxu0 %v337
        %1523 = vmatprep.subr.bf16.mxu0 0
        %1524 = vmatpush1.bf16.msra.mxu0 %v338
        %1525 = vmatprep.subr.bf16.mxu0 0
        %1526 = vmatpush1.bf16.msra.mxu0 0
        %1527 = vmatprep.subr.bf16.mxu0 0
        %1528 = vmatpush1.bf16.msra.mxu0 0
        %1529 = vmatprep.subr.bf16.mxu0 0
        %1530 = vmatpush1.bf16.msra.mxu0 0
        %1531 = vmatprep.subr.bf16.mxu0 0
        %1532 = vmatpush1.bf16.msra.mxu0 0
        %1533 = vmatprep.subr.bf16.mxu0 0
        %1534 = vmatpush1.bf16.msra.mxu0 0
        %1535 = vmatprep.subr.bf16.mxu0 0
        %1536 = vmatpush1.bf16.msra.mxu0 0
        %1537 = vmatprep.subr.bf16.mxu0 0
        %1538 = vmatpush1.bf16.msra.mxu0 0
        %1539 = vmatprep.subr.bf16.mxu0 0
        %1540 = vmatpush1.bf16.msra.mxu0 0
        %1541 = vmatprep.subr.bf16.mxu0 0
        %1542 = vmatpush1.bf16.msra.mxu0 0
        %1543 = vmatprep.subr.bf16.mxu0 0
        %1544 = vmatpush1.bf16.msra.mxu0 0
        %1545 = vmatprep.subr.bf16.mxu0 0
        %1546 = vmatpush1.bf16.msra.mxu0 0
        %1547 = vmatprep.subr.bf16.mxu0 0
        %1548 = vmatpush1.bf16.msra.mxu0 0
        %1549 = vmatprep.subr.bf16.mxu0 0
        %1550 = vmatpush1.bf16.msra.mxu0 0
        %1551 = vmatprep.subr.bf16.mxu0 0
        %1552 = vmatpush1.bf16.msra.mxu0 0
        %1553 = vmatprep.mubr.bf16.mxu0 0
        %1554 = vmatmul.mubr.bf16.gmra.mrb[0].mxu0 %v1519
        %v1555 = vpop.f32.mrb[0].mxu0
        %v1556 = vadd.f32 %v1514, %v1555
        %v1557 = vpop.f32.mrb[0].mxu0
        %v1558 = vpop.f32.mrb[0].mxu0
        %v1559 = vpop.f32.mrb[0].mxu0
        %1560 = vdwg.mxu0
        %v1561 = vxor.u32 %v1507, 2147483648
        %v1562 = vmul.f32 %v1561, 1.442695
        %v1563 = vpow.pop %v1562
        %v1564 = vadd.f32 %v1563, 1.0
        %v1565 = vrcp.pop %v1564
        %v1566 = vmul.f32 1.0, %v1565
        %v1567 = vtanh.pop %v1507
        %v1568 = vmul.f32 %v1566, %v1453
        %1570 = vrot.lane.b32.xlu0 %v1567, 32
        %v1571 = vpop.permute.xlu0 %1570
        %v1573 = vmul.f32 %v1566, %v1571
        %1575 = vrot.lane.b32.xlu0 %v1573, 32
        %v1576 = vpop.permute.xlu0 %1575
        %v1578 = vadd.f32 %v1568, %v1576
        %v1579 = vtanh.pop %v1578
        %1581 = vrot.lane.b32.xlu0 %v1579, 32
        %v1582 = vpop.permute.xlu0 %1581
        %v1584 = vmul.f32 %v1566, %v1582
        %v1585 = vxor.u32 %v1556, 2147483648
        %v1586 = vmul.f32 %v1585, 1.442695
        %v1587 = vpow.pop %v1586
        %v1588 = vadd.f32 %v1587, 1.0
        %v1589 = vrcp.pop %v1588
        %v1590 = vmul.f32 1.0, %v1589
        %v1591 = vtanh.pop %v1556
        %v1592 = vmul.f32 %v1590, %v1460
        %1594 = vrot.lane.b32.xlu0 %v1591, 32
        %v1595 = vpop.permute.xlu0 %1594
        %v1597 = vmul.f32 %v1590, %v1595
        %1599 = vrot.lane.b32.xlu0 %v1597, 32
        %v1600 = vpop.permute.xlu0 %1599
        %v1602 = vadd.f32 %v1592, %v1600
        %v1603 = vtanh.pop %v1602
        %1605 = vrot.lane.b32.xlu0 %v1603, 32
        %v1606 = vpop.permute.xlu0 %1605
        %v1608 = vmul.f32 %v1590, %v1606
        %v1609 = vstv %s1461
        %vm1610 = vcmp.gt.s32.totalorder %v261, %v1609
        %vm1611 = vcmp.le.s32.totalorder %v261, %v1609
        %v1612 = vsel %vm1610, 1, 0
        %1613 = vset.pattern.permute.xlu0 0
        %1614 = vperm.xlu0 %1613, %v1612
        %v1615 = vpop.permute.xlu0 %1614
        %vm1616 = vcmp.eq.s32.totalorder %v1615, 1
        %v1617 = vsel %vm1616, %v1584, %v1452
        %v1618 = vsel %vm1616, %v1578, %v1453
        %v1619 = vsel %vm1611, 1, 0
        %1620 = vset.pattern.permute.xlu0 1
        %1621 = vperm.xlu0 %1620, %v1619
        %v1622 = vpop.permute.xlu0 %1621
        %vm1623 = vcmp.eq.s32.totalorder %v1622, 1
        %v1624 = vsel %vm1623, %v1608, %v1459
        %v1625 = vsel %vm1623, %v1602, %v1460
        %1627 = vrot.lane.b32.xlu0 %v1617, 64
        %v1628 = vpop.permute.xlu0 %1627
        %vm1630 = vcmask 257024
        %1631 = vst.msk [vmem:[#allocation2] sm:$0xf] %vm1630, %v1628
        %1633 = vrot.lane.b32.xlu0 %v1618, 96
        %v1634 = vpop.permute.xlu0 %1633
        %1636 = vst.msk [vmem:[#allocation3] sm:$0xf] %vm1630, %v1634
        %1638 = vrot.lane.b32.xlu0 %v1624, 64
        %v1639 = vpop.permute.xlu0 %1638
        %1641 = vst.msk [vmem:[#allocation4] sm:$0xf] %vm1630, %v1639
        %1643 = vrot.lane.b32.xlu0 %v1625, 96
        %v1644 = vpop.permute.xlu0 %1643
        %1646 = vst.msk [vmem:[#allocation5] sm:$0xf] %vm1630, %v1644
        %p1647 = scmp.eq.s32.totalorder %s17, 1
        // Predicated region
        $region45: #{lstm_encoder_forward.1} parent=39 // pred_check
          %p1648 = pneg %p1647
        $region46: #{lstm_encoder_forward.1} parent=39 // pred_check_branch
          %1650 = sbr.rel (%p1648) target = $region48
        $region47: #{lstm_encoder_forward.1} parent=39 // pred_region
          %1651 = vrot.lane.b32.xlu0 %v1624, 96
          %v1652 = vpop.permute.xlu0 %1651
          %v1654 = vsel %vm281, %v1628, %v1652
          %vm1655 = vcmask 519168
          %1656 = vst.msk [vmem:[#allocation6] sm:$0xf] %vm1655, %v1654
        $region48: #{lstm_encoder_forward.1} parent=39 // pred_fallthru
          _
        // Predicated region
        $region49: #{lstm_encoder_forward.1} parent=39 // pred_check
          %p1657 = pneg %p147
        $region50: #{lstm_encoder_forward.1} parent=39 // pred_check_branch
          %1659 = sbr.rel (%p1657) target = $region52
        $region51: #{lstm_encoder_forward.1} parent=39 // pred_region
          %s1661 = ssub.s32 64, 64
          %1662 = vsyncadd [#allocation7], %s1661
          %s1664 = sshll.u32 [#allocation6], 4
          %s1665 = int_to_ptr.vmem [resolvable:$true] %s1664
          %1667 = dma.vmem_to_hbm [thread:$0]  %s1665, 64, %s5, [#allocation7]
        $region52: #{lstm_encoder_forward.1} parent=39 // pred_fallthru
          _
        // Predicated region
        $region53: #{lstm_encoder_forward.1} parent=39 // pred_check
          %p1668 = pneg %p147
        $region54: #{lstm_encoder_forward.1} parent=39 // pred_check_branch
          %1670 = sbr.rel (%p1668) target = $region56
        $region55: #{lstm_encoder_forward.1} parent=39 // pred_region
          %1671 = dma.done [#allocation7], 64
        $region56: #{lstm_encoder_forward.1} parent=39 // pred_fallthru
          _
      $region40: #{lstm_encoder_forward.1} parent=5 // pred_fallthru
        _
      %p1672 = scmp.le.s32.totalorder 2, %s12
      // Predicated region
      $region57: #{lstm_encoder_forward.1} parent=5 // pred_check
        %p1673 = pneg %p1672
      $region58: #{lstm_encoder_forward.1} parent=5 // pred_check_branch
        %1675 = sbr.rel (%p1673) target = $region60
      $region59: #{lstm_encoder_forward.1} parent=5 // pred_region
        %s1676 = ssub.s32 %s12, 2
      $region60: #{lstm_encoder_forward.1} parent=5 // pred_fallthru
        _
    $region6: #{lstm_encoder_forward.1} parent=1 // loop_footer
      %s16 = sadd.s32 1, %s12
    $region7: #{lstm_encoder_forward.1} parent=1 // loop_footer_branch
      %11 = sbr.rel target = $region3
    $region8: #{lstm_encoder_forward.1} parent=1 // loop_exit
      _
    %1677 = vsyncpa [#allocation7], 1
    %s1678 = scalar_lea.sflag [#allocation7], 1
    %1679 = vsyncpa %s1678, 1

</llo_original>
